<compile_context>
chip_gen: v5e
topology: v5e:2x2
jax: 0.10.0
libtpu: 0.0.40
codegen_flags: <defaults>
</compile_context>

<pallas_src>
import functools

import numpy as np
import jax
import jax.numpy as jnp
from jax import lax
from jax.experimental import pallas as pl
from jax.experimental.pallas import tpu as pltpu


_LAT_PAD = 128   # final latent padded to a full lane width (lane-dense store)
_ROW_PAD = 8     # final output padded to a full sublane tile


# ------------------------------ fused kernel ---------------------------------

def _encoder_kernel(*refs, n_layers):
    """Whole encoder for `bt` stacked batch elements.

    refs = (x_ref,
            L1, R1, b1, ..., Ln, Rn, bn,     # packed conv layers (L,R bf16, b f32)
            P, Rf, bf,                       # packed pool matrix + 1x1 conv
            o_ref,                           # (ROW_PAD, LAT_PAD) f32
            g_ref)                           # VMEM scratch for gathered operand
    """
    n_consts = 3 * n_layers + 3
    x_ref = refs[0]
    consts = refs[1:1 + n_consts]
    o_ref = refs[1 + n_consts]
    g_ref = refs[2 + n_consts]

    x = x_ref[...].astype(jnp.bfloat16)                       # (bt*H, W*Cin)
    for layer in range(n_layers):                             # static unroll
        l_ref, r_ref, b_ref = consts[3 * layer:3 * layer + 3]
        k = l_ref.shape[0]
        rows = l_ref.shape[1]                                 # bt * H_out
        seg = x.shape[1]                                      # W_in * C_in
        # Row-gather (reflect pad + stride + batch block-diag folded into L),
        # written at static lane offsets into the K-stacked operand.
        for kh in range(k):                                   # static unroll (k <= 7)
            g = jnp.dot(l_ref[kh], x, preferred_element_type=jnp.float32)
            g_ref[0:rows, kh * seg:(kh + 1) * seg] = g.astype(jnp.bfloat16)
        gathered = g_ref[0:rows, 0:k * seg]                   # (rows, k*seg)
        # Single big MXU dot per layer: conv weights + column gather in Rstack.
        acc = jnp.dot(gathered, r_ref[...],
                      preferred_element_type=jnp.float32)     # (rows, Wo*Cout) f32
        x = jnp.maximum(acc + b_ref[...], 0.0).astype(jnp.bfloat16)

    # AdaptiveAvgPool2d(1) as a tiny pooling-matrix matmul (1/HW folded into P),
    # then the packed 1x1 conv; rows >= bt are zero-padding for a clean (8,128)
    # full-tile store.
    p_ref = consts[3 * n_layers]
    rf_ref = consts[3 * n_layers + 1]
    bf_ref = consts[3 * n_layers + 2]
    pooled = jnp.dot(p_ref[...], x,
                     preferred_element_type=jnp.float32).astype(jnp.bfloat16)
    y = jnp.dot(pooled, rf_ref[...], preferred_element_type=jnp.float32)
    o_ref[...] = y + bf_ref[...]                              # (ROW_PAD, LAT_PAD) f32


# ----------------------- host-side weight packing -----------------------------

def _reflect(i, n):
    if i < 0:
        return -i
    if i >= n:
        return 2 * (n - 1) - i
    return i


def _pack_conv(w, b, k, s, p, h_in, w_in, bt):
    """Lower a reflect-pad conv (PyTorch OIHW weight, bias) acting on a
    batch-stacked activation (bt*H, W*Cin) to:
        out(bt*Ho, Wo*Cout) = relu( [L[0]@x | ... | L[k-1]@x] @ Rstack + bias )
    L[kh] is block-diagonal (I_bt (x) one-hot row gather); Rstack is the
    K-stacked (k*Win*Cin, Wo*Cout) matrix embedding the conv weights together
    with the reflect/stride column gather.  L/R are bf16 (L is exact 0/1).
    """
    c_out, c_in = int(w.shape[0]), int(w.shape[1])
    h_out = (h_in + 2 * p - k) // s + 1
    w_out = (w_in + 2 * p - k) // s + 1
    w_np = np.asarray(w, dtype=np.float32)
    b_np = np.asarray(b, dtype=np.float32)

    L = np.zeros((k, bt * h_out, bt * h_in), np.float32)
    for kh in range(k):
        for ho in range(h_out):
            hi = _reflect(ho * s - p + kh, h_in)
            for bi in range(bt):
                L[kh, bi * h_out + ho, bi * h_in + hi] = 1.0

    seg = w_in * c_in
    R = np.zeros((k * seg, w_out * c_out), np.float32)
    for kh in range(k):
        base = kh * seg
        for kw in range(k):
            wk = w_np[:, :, kh, kw].T                          # (Cin, Cout)
            for wo in range(w_out):
                wi = _reflect(wo * s - p + kw, w_in)
                # reflect-boundary collisions correctly accumulate
                R[base + wi * c_in: base + (wi + 1) * c_in,
                  wo * c_out:(wo + 1) * c_out] += wk

    bias = np.tile(b_np, w_out)[None, :]                       # (1, Wo*Cout) f32
    return (jnp.asarray(L, jnp.bfloat16), jnp.asarray(R, jnp.bfloat16),
            jnp.asarray(bias, jnp.float32), h_out, w_out)


def _pack_pool_fc(wf, bf, c_in, h_sp, w_sp, bt,
                  latent_pad=_LAT_PAD, row_pad=_ROW_PAD):
    """AdaptiveAvgPool2d(1) + Conv2d(c_in, latent, 1) folded into:
         y = P @ x4 @ Rf + bias
    P (row_pad, bt*h_sp) sums rows per batch element with 1/(H*W) folded in
    (rows >= bt are zero padding); Rf (w_sp*c_in, latent_pad) sums over the W
    positions against wf; latent lane-padded to 128."""
    latent = int(wf.shape[0])
    wf_np = np.asarray(wf, np.float32).reshape(latent, c_in)
    scale = 1.0 / float(h_sp * w_sp)
    P = np.zeros((row_pad, bt * h_sp), np.float32)
    for bi in range(bt):
        P[bi, bi * h_sp:(bi + 1) * h_sp] = scale
    Rf = np.zeros((w_sp * c_in, latent_pad), np.float32)
    for wpos in range(w_sp):
        Rf[wpos * c_in:(wpos + 1) * c_in, :latent] = wf_np.T
    bfp = np.zeros((1, latent_pad), np.float32)
    bfp[0, :latent] = np.asarray(bf, np.float32)
    return (jnp.asarray(P, jnp.bfloat16), jnp.asarray(Rf, jnp.bfloat16),
            jnp.asarray(bfp, jnp.float32))


def _const_spec(arr):
    # Constant weights: full-array block, block index never changes, so the
    # pipeline fetches them once per core.  (pl.Buffered(1) would also halve
    # their VMEM footprint, but it is negligible at these sizes.)
    zeros = (0,) * arr.ndim
    return pl.BlockSpec(arr.shape, lambda i, _z=zeros: _z)


# ------------------------------ module wrapper ---------------------------------

def make_class_model_encoder(conv_params, final_params, in_ch, height, width,
                             latent_dim, batch):
    """Pack weights once on the host, return a jit-able forward function."""
    # Batch-tile: aim for bt*H ~ 128 rows per grid step (capped by the batch),
    # so the MXU sees a reasonable M while large batches still span >= 2 grid
    # steps (both v7x TensorCores fed under dimension_semantics=('parallel',)).
    bt = max(1, min(int(batch), max(1, 128 // height)))

    consts = []
    hh, ww = height, width
    c_cur = in_ch
    max_rows, max_kseg = 8, 128
    for prm in conv_params:
        k = prm['k']
        seg = ww * c_cur
        L, R, bias, hh, ww = _pack_conv(prm['w'], prm['b'], k, prm['s'],
                                        prm['p'], hh, ww, bt)
        max_rows = max(max_rows, bt * hh)
        max_kseg = max(max_kseg, k * seg)
        c_cur = int(prm['w'].shape[0])
        consts += [L, R, bias]
    max_rows = -(-max_rows // 8) * 8
    max_kseg = -(-max_kseg // 128) * 128

    wf, bf = final_params
    P, Rf, bfp = _pack_pool_fc(wf, bf, c_cur, hh, ww, bt)
    consts += [P, Rf, bfp]
    n_layers = len(conv_params)

    def encode(x_nchw):
        B, C, H, W = x_nchw.shape
        num_tiles = -(-B // bt)
        b_pad = num_tiles * bt
        # NCHW -> lane-dense (B*H, W*C); single layout change at module entry.
        x2d = jnp.transpose(x_nchw, (0, 2, 3, 1)).reshape(B, H, W * C)
        if b_pad != B:
            x2d = jnp.concatenate(
                [x2d, jnp.zeros((b_pad - B, H, W * C), x2d.dtype)], axis=0)
        x2d = x2d.reshape(b_pad * H, W * C)

        in_specs = [pl.BlockSpec((bt * H, W * C), lambda i: (i, 0))]
        in_specs += [_const_spec(a) for a in consts]
        out_spec = pl.BlockSpec((_ROW_PAD, _LAT_PAD), lambda i: (i, 0))

        out = pl.pallas_call(
            functools.partial(_encoder_kernel, n_layers=n_layers),
            out_shape=jax.ShapeDtypeStruct((num_tiles * _ROW_PAD, _LAT_PAD),
                                           jnp.float32),
            grid=(num_tiles,),
            in_specs=in_specs,
            out_specs=out_spec,
            scratch_shapes=[pltpu.VMEM((max_rows, max_kseg), jnp.bfloat16)],
            compiler_params=pltpu.CompilerParams(
                dimension_semantics=("parallel",)),
        )(x2d, *consts)
        # Latent was written lane/row-padded; slice back to (B, latent, 1, 1).
        lat = out.reshape(num_tiles, _ROW_PAD, _LAT_PAD)[:, :bt, :latent_dim]
        lat = lat.reshape(b_pad, latent_dim)[:B]
        return lat.reshape(B, latent_dim, 1, 1)

    return encode


# ----------------------------- parameter init ----------------------------------

def init_params(key, downs, ind_im, dim, latent_dim):
    """PyTorch-default-like uniform init for every conv layer."""
    specs = [(ind_im, dim, 7, 1, 3)]
    d = dim
    for _ in range(2):
        specs.append((d, 2 * d, 4, 2, 1))
        d *= 2
    for _ in range(downs - 2):
        specs.append((d, d, 4, 2, 1))

    conv_params = []
    for idx, (cin, cout, k, s, p) in enumerate(specs):
        kw_key, kb_key = jax.random.split(jax.random.fold_in(key, idx))
        scale = 1.0 / (cin * k * k) ** 0.5
        w = jax.random.uniform(kw_key, (cout, cin, k, k), jnp.float32, -scale, scale)
        b = jax.random.uniform(kb_key, (cout,), jnp.float32, -scale, scale)
        conv_params.append({'w': w, 'b': b, 'k': k, 's': s, 'p': p})

    kw_key, kb_key = jax.random.split(jax.random.fold_in(key, 1000))
    scale = 1.0 / d ** 0.5
    wf = jax.random.uniform(kw_key, (latent_dim, d, 1, 1), jnp.float32, -scale, scale)
    bf = jax.random.uniform(kb_key, (latent_dim,), jnp.float32, -scale, scale)
    return conv_params, (wf, bf), d  # d == self.output_dim


# ----------------------------- pure-XLA reference -------------------------------

def _reference_encoder(x_nchw, conv_params, final_params):
    x = x_nchw
    for p in conv_params:
        pad = p['p']
        xp = jnp.pad(x, ((0, 0), (0, 0), (pad, pad), (pad, pad)), mode='reflect')
        x = lax.conv_general_dilated(
            xp, p['w'], window_strides=(p['s'], p['s']), padding='VALID',
            dimension_numbers=('NCHW', 'OIHW', 'NCHW'),
            precision=lax.Precision.HIGHEST)
        x = jnp.maximum(x + p['b'][None, :, None, None], 0.0)
    pooled = jnp.mean(x, axis=(2, 3))                          # (B, C)
    wf, bf = final_params
    y = jnp.dot(pooled, wf.reshape(wf.shape[0], -1).T,
                precision=lax.Precision.HIGHEST) + bf
    return y.reshape(x.shape[0], -1, 1, 1)


# ----------------------------------- main ---------------------------------------

if __name__ == "__main__":
    key = jax.random.PRNGKey(0)

    # Module hyperparams (small synthetic instance): downs=3, norm='none',
    # activ='relu', pad_type='reflect'.
    downs, ind_im, dim, latent_dim = 3, 4, 8, 8
    B, H, W = 2, 16, 16

    conv_params, final_params, output_dim = init_params(
        jax.random.fold_in(key, 42), downs, ind_im, dim, latent_dim)

    x = jax.random.normal(jax.random.fold_in(key, 7), (B, ind_im, H, W), jnp.float32)

    encode = make_class_model_encoder(conv_params, final_params, ind_im, H, W,
                                      latent_dim, batch=B)
    y = jax.block_until_ready(jax.jit(encode)(x))

    assert y.shape == (B, latent_dim, 1, 1), y.shape
    assert bool(jnp.all(jnp.isfinite(y)))

    # Cross-check the fused bf16 kernel against an f32 pure-XLA reference of the
    # module (f32 accumulation keeps the error well inside this tolerance).
    y_ref = jax.block_until_ready(_reference_encoder(x, conv_params, final_params))
    max_err = float(jnp.max(jnp.abs(y - y_ref)))
    assert bool(jnp.allclose(y, y_ref, atol=1e-2, rtol=1e-2)), max_err

    print("KERNEL_OK")
</pallas_src>

<mosaic_0001>
module attributes {stable_mosaic.version = 11 : i64} {
  func.func @_encoder_kernel(%arg0: i32, %arg1: memref<32x64xf32, #tpu.memory_space<vmem>>, %arg2: memref<7x32x32xbf16, #tpu.memory_space<vmem>>, %arg3: memref<448x128xbf16, #tpu.memory_space<vmem>>, %arg4: memref<1x128xf32, #tpu.memory_space<vmem>>, %arg5: memref<4x16x32xbf16, #tpu.memory_space<vmem>>, %arg6: memref<512x128xbf16, #tpu.memory_space<vmem>>, %arg7: memref<1x128xf32, #tpu.memory_space<vmem>>, %arg8: memref<4x8x16xbf16, #tpu.memory_space<vmem>>, %arg9: memref<512x128xbf16, #tpu.memory_space<vmem>>, %arg10: memref<1x128xf32, #tpu.memory_space<vmem>>, %arg11: memref<4x4x8xbf16, #tpu.memory_space<vmem>>, %arg12: memref<512x64xbf16, #tpu.memory_space<vmem>>, %arg13: memref<1x64xf32, #tpu.memory_space<vmem>>, %arg14: memref<8x4xbf16, #tpu.memory_space<vmem>>, %arg15: memref<64x128xbf16, #tpu.memory_space<vmem>>, %arg16: memref<1x128xf32, #tpu.memory_space<vmem>>, %arg17: memref<8x128xf32, #tpu.memory_space<vmem>>, %arg18: memref<32x512xbf16, #tpu.memory_space<vmem>>) attributes {dimension_semantics = [#tpu.dimension_semantics<parallel>], iteration_bounds = array<i64: 1>, scalar_prefetch = 0 : i64, scratch_operands = 1 : i64, tpu.core_type = #tpu.core_type<tc>, window_params = [{transform_indices = @transform_0, window_bounds = array<i64: 32, 64>}, {pipeline_mode = #tpu.pipeline_mode<synchronous>, transform_indices = @transform_1, window_bounds = array<i64: 7, 32, 32>}, {pipeline_mode = #tpu.pipeline_mode<synchronous>, transform_indices = @transform_2, window_bounds = array<i64: 448, 128>}, {pipeline_mode = #tpu.pipeline_mode<synchronous>, transform_indices = @transform_3, window_bounds = array<i64: 1, 128>}, {pipeline_mode = #tpu.pipeline_mode<synchronous>, transform_indices = @transform_4, window_bounds = array<i64: 4, 16, 32>}, {pipeline_mode = #tpu.pipeline_mode<synchronous>, transform_indices = @transform_5, window_bounds = array<i64: 512, 128>}, {pipeline_mode = #tpu.pipeline_mode<synchronous>, transform_indices = @transform_6, window_bounds = array<i64: 1, 128>}, {pipeline_mode = #tpu.pipeline_mode<synchronous>, transform_indices = @transform_7, window_bounds = array<i64: 4, 8, 16>}, {pipeline_mode = #tpu.pipeline_mode<synchronous>, transform_indices = @transform_8, window_bounds = array<i64: 512, 128>}, {pipeline_mode = #tpu.pipeline_mode<synchronous>, transform_indices = @transform_9, window_bounds = array<i64: 1, 128>}, {pipeline_mode = #tpu.pipeline_mode<synchronous>, transform_indices = @transform_10, window_bounds = array<i64: 4, 4, 8>}, {pipeline_mode = #tpu.pipeline_mode<synchronous>, transform_indices = @transform_11, window_bounds = array<i64: 512, 64>}, {pipeline_mode = #tpu.pipeline_mode<synchronous>, transform_indices = @transform_12, window_bounds = array<i64: 1, 64>}, {pipeline_mode = #tpu.pipeline_mode<synchronous>, transform_indices = @transform_13, window_bounds = array<i64: 8, 4>}, {pipeline_mode = #tpu.pipeline_mode<synchronous>, transform_indices = @transform_14, window_bounds = array<i64: 64, 128>}, {pipeline_mode = #tpu.pipeline_mode<synchronous>, transform_indices = @transform_15, window_bounds = array<i64: 1, 128>}, {transform_indices = @transform_16, window_bounds = array<i64: 8, 128>}]} {
    %c0 = arith.constant 0 : index
    %c0_0 = arith.constant 0 : index
    %0 = vector.load %arg1[%c0, %c0_0] : memref<32x64xf32, #tpu.memory_space<vmem>>, vector<32x64xf32>
    %1 = arith.truncf %0 : vector<32x64xf32> to vector<32x64xbf16>
    %c0_1 = arith.constant 0 : index
    %c0_2 = arith.constant 0 : index
    %c0_3 = arith.constant 0 : index
    %2 = vector.load %arg2[%c0_1, %c0_2, %c0_3] : memref<7x32x32xbf16, #tpu.memory_space<vmem>>, vector<1x32x32xbf16>
    %3 = vector.shape_cast %2 : vector<1x32x32xbf16> to vector<32x32xbf16>
    %cst = arith.constant dense<0.000000e+00> : vector<32x64xf32>
    %4 = tpu.matmul %3, %1, %cst {dimension_numbers = #tpu.dot_dimension_numbers<[1], [0], [0], [1], [0, 0, 1, 1], [], []>} : vector<32x32xbf16>, vector<32x64xbf16>, vector<32x64xf32> -> vector<32x64xf32>
    %5 = arith.truncf %4 : vector<32x64xf32> to vector<32x64xbf16>
    %c0_4 = arith.constant 0 : index
    %c0_5 = arith.constant 0 : index
    %6 = vector.load %arg18[%c0_4, %c0_5] : memref<32x512xbf16, #tpu.memory_space<vmem>>, vector<32x64xbf16>
    tpu.vector_store %arg18[%c0_4, %c0_5], %5 {strides = array<i32>} : memref<32x512xbf16, #tpu.memory_space<vmem>>, vector<32x64xbf16>,
    %c1 = arith.constant 1 : index
    %c0_6 = arith.constant 0 : index
    %c0_7 = arith.constant 0 : index
    %7 = vector.load %arg2[%c1, %c0_6, %c0_7] : memref<7x32x32xbf16, #tpu.memory_space<vmem>>, vector<1x32x32xbf16>
    %8 = vector.shape_cast %7 : vector<1x32x32xbf16> to vector<32x32xbf16>
    %cst_8 = arith.constant dense<0.000000e+00> : vector<32x64xf32>
    %9 = tpu.matmul %8, %1, %cst_8 {dimension_numbers = #tpu.dot_dimension_numbers<[1], [0], [0], [1], [0, 0, 1, 1], [], []>} : vector<32x32xbf16>, vector<32x64xbf16>, vector<32x64xf32> -> vector<32x64xf32>
    %10 = arith.truncf %9 : vector<32x64xf32> to vector<32x64xbf16>
    %c0_9 = arith.constant 0 : index
    %c64 = arith.constant 64 : index
    %11 = vector.load %arg18[%c0_9, %c64] : memref<32x512xbf16, #tpu.memory_space<vmem>>, vector<32x64xbf16>
    tpu.vector_store %arg18[%c0_9, %c64], %10 {strides = array<i32>} : memref<32x512xbf16, #tpu.memory_space<vmem>>, vector<32x64xbf16>,
    %c2 = arith.constant 2 : index
    %c0_10 = arith.constant 0 : index
    %c0_11 = arith.constant 0 : index
    %12 = vector.load %arg2[%c2, %c0_10, %c0_11] : memref<7x32x32xbf16, #tpu.memory_space<vmem>>, vector<1x32x32xbf16>
    %13 = vector.shape_cast %12 : vector<1x32x32xbf16> to vector<32x32xbf16>
    %cst_12 = arith.constant dense<0.000000e+00> : vector<32x64xf32>
    %14 = tpu.matmul %13, %1, %cst_12 {dimension_numbers = #tpu.dot_dimension_numbers<[1], [0], [0], [1], [0, 0, 1, 1], [], []>} : vector<32x32xbf16>, vector<32x64xbf16>, vector<32x64xf32> -> vector<32x64xf32>
    %15 = arith.truncf %14 : vector<32x64xf32> to vector<32x64xbf16>
    %c0_13 = arith.constant 0 : index
    %c128 = arith.constant 128 : index
    %16 = vector.load %arg18[%c0_13, %c128] : memref<32x512xbf16, #tpu.memory_space<vmem>>, vector<32x64xbf16>
    tpu.vector_store %arg18[%c0_13, %c128], %15 {strides = array<i32>} : memref<32x512xbf16, #tpu.memory_space<vmem>>, vector<32x64xbf16>,
    %c3 = arith.constant 3 : index
    %c0_14 = arith.constant 0 : index
    %c0_15 = arith.constant 0 : index
    %17 = vector.load %arg2[%c3, %c0_14, %c0_15] : memref<7x32x32xbf16, #tpu.memory_space<vmem>>, vector<1x32x32xbf16>
    %18 = vector.shape_cast %17 : vector<1x32x32xbf16> to vector<32x32xbf16>
    %cst_16 = arith.constant dense<0.000000e+00> : vector<32x64xf32>
    %19 = tpu.matmul %18, %1, %cst_16 {dimension_numbers = #tpu.dot_dimension_numbers<[1], [0], [0], [1], [0, 0, 1, 1], [], []>} : vector<32x32xbf16>, vector<32x64xbf16>, vector<32x64xf32> -> vector<32x64xf32>
    %20 = arith.truncf %19 : vector<32x64xf32> to vector<32x64xbf16>
    %c0_17 = arith.constant 0 : index
    %c192 = arith.constant 192 : index
    %21 = vector.load %arg18[%c0_17, %c192] : memref<32x512xbf16, #tpu.memory_space<vmem>>, vector<32x64xbf16>
    tpu.vector_store %arg18[%c0_17, %c192], %20 {strides = array<i32>} : memref<32x512xbf16, #tpu.memory_space<vmem>>, vector<32x64xbf16>,
    %c4 = arith.constant 4 : index
    %c0_18 = arith.constant 0 : index
    %c0_19 = arith.constant 0 : index
    %22 = vector.load %arg2[%c4, %c0_18, %c0_19] : memref<7x32x32xbf16, #tpu.memory_space<vmem>>, vector<1x32x32xbf16>
    %23 = vector.shape_cast %22 : vector<1x32x32xbf16> to vector<32x32xbf16>
    %cst_20 = arith.constant dense<0.000000e+00> : vector<32x64xf32>
    %24 = tpu.matmul %23, %1, %cst_20 {dimension_numbers = #tpu.dot_dimension_numbers<[1], [0], [0], [1], [0, 0, 1, 1], [], []>} : vector<32x32xbf16>, vector<32x64xbf16>, vector<32x64xf32> -> vector<32x64xf32>
    %25 = arith.truncf %24 : vector<32x64xf32> to vector<32x64xbf16>
    %c0_21 = arith.constant 0 : index
    %c256 = arith.constant 256 : index
    %26 = vector.load %arg18[%c0_21, %c256] : memref<32x512xbf16, #tpu.memory_space<vmem>>, vector<32x64xbf16>
    tpu.vector_store %arg18[%c0_21, %c256], %25 {strides = array<i32>} : memref<32x512xbf16, #tpu.memory_space<vmem>>, vector<32x64xbf16>,
    %c5 = arith.constant 5 : index
    %c0_22 = arith.constant 0 : index
    %c0_23 = arith.constant 0 : index
    %27 = vector.load %arg2[%c5, %c0_22, %c0_23] : memref<7x32x32xbf16, #tpu.memory_space<vmem>>, vector<1x32x32xbf16>
    %28 = vector.shape_cast %27 : vector<1x32x32xbf16> to vector<32x32xbf16>
    %cst_24 = arith.constant dense<0.000000e+00> : vector<32x64xf32>
    %29 = tpu.matmul %28, %1, %cst_24 {dimension_numbers = #tpu.dot_dimension_numbers<[1], [0], [0], [1], [0, 0, 1, 1], [], []>} : vector<32x32xbf16>, vector<32x64xbf16>, vector<32x64xf32> -> vector<32x64xf32>
    %30 = arith.truncf %29 : vector<32x64xf32> to vector<32x64xbf16>
    %c0_25 = arith.constant 0 : index
    %c320 = arith.constant 320 : index
    %31 = vector.load %arg18[%c0_25, %c320] : memref<32x512xbf16, #tpu.memory_space<vmem>>, vector<32x64xbf16>
    tpu.vector_store %arg18[%c0_25, %c320], %30 {strides = array<i32>} : memref<32x512xbf16, #tpu.memory_space<vmem>>, vector<32x64xbf16>,
    %c6 = arith.constant 6 : index
    %c0_26 = arith.constant 0 : index
    %c0_27 = arith.constant 0 : index
    %32 = vector.load %arg2[%c6, %c0_26, %c0_27] : memref<7x32x32xbf16, #tpu.memory_space<vmem>>, vector<1x32x32xbf16>
    %33 = vector.shape_cast %32 : vector<1x32x32xbf16> to vector<32x32xbf16>
    %cst_28 = arith.constant dense<0.000000e+00> : vector<32x64xf32>
    %34 = tpu.matmul %33, %1, %cst_28 {dimension_numbers = #tpu.dot_dimension_numbers<[1], [0], [0], [1], [0, 0, 1, 1], [], []>} : vector<32x32xbf16>, vector<32x64xbf16>, vector<32x64xf32> -> vector<32x64xf32>
    %35 = arith.truncf %34 : vector<32x64xf32> to vector<32x64xbf16>
    %c0_29 = arith.constant 0 : index
    %c384 = arith.constant 384 : index
    %36 = vector.load %arg18[%c0_29, %c384] : memref<32x512xbf16, #tpu.memory_space<vmem>>, vector<32x64xbf16>
    tpu.vector_store %arg18[%c0_29, %c384], %35 {strides = array<i32>} : memref<32x512xbf16, #tpu.memory_space<vmem>>, vector<32x64xbf16>,
    %c0_30 = arith.constant 0 : index
    %c0_31 = arith.constant 0 : index
    %37 = vector.load %arg18[%c0_30, %c0_31] : memref<32x512xbf16, #tpu.memory_space<vmem>>, vector<32x448xbf16>
    %c0_32 = arith.constant 0 : index
    %c0_33 = arith.constant 0 : index
    %38 = vector.load %arg3[%c0_32, %c0_33] : memref<448x128xbf16, #tpu.memory_space<vmem>>, vector<448x128xbf16>
    %cst_34 = arith.constant dense<0.000000e+00> : vector<32x128xf32>
    %39 = tpu.matmul %37, %38, %cst_34 {dimension_numbers = #tpu.dot_dimension_numbers<[1], [0], [0], [1], [0, 0, 1, 1], [], []>} : vector<32x448xbf16>, vector<448x128xbf16>, vector<32x128xf32> -> vector<32x128xf32>
    %c0_35 = arith.constant 0 : index
    %c0_36 = arith.constant 0 : index
    %40 = vector.load %arg4[%c0_35, %c0_36] : memref<1x128xf32, #tpu.memory_space<vmem>>, vector<1x128xf32>
    %41 = vector.broadcast %40 : vector<1x128xf32> to vector<32x128xf32>
    %42 = arith.addf %39, %41 : vector<32x128xf32>
    %cst_37 = arith.constant 0.000000e+00 : f32
    %43 = vector.broadcast %cst_37 : f32 to vector<32x128xf32>
    %44 = arith.maximumf %42, %43 : vector<32x128xf32>
    %45 = arith.truncf %44 : vector<32x128xf32> to vector<32x128xbf16>
    %c0_38 = arith.constant 0 : index
    %c0_39 = arith.constant 0 : index
    %c0_40 = arith.constant 0 : index
    %46 = vector.load %arg5[%c0_38, %c0_39, %c0_40] : memref<4x16x32xbf16, #tpu.memory_space<vmem>>, vector<1x16x32xbf16>
    %47 = vector.shape_cast %46 : vector<1x16x32xbf16> to vector<16x32xbf16>
    %cst_41 = arith.constant dense<0.000000e+00> : vector<16x128xf32>
    %48 = tpu.matmul %47, %45, %cst_41 {dimension_numbers = #tpu.dot_dimension_numbers<[1], [0], [0], [1], [0, 0, 1, 1], [], []>} : vector<16x32xbf16>, vector<32x128xbf16>, vector<16x128xf32> -> vector<16x128xf32>
    %49 = arith.truncf %48 : vector<16x128xf32> to vector<16x128xbf16>
    %c0_42 = arith.constant 0 : index
    %c0_43 = arith.constant 0 : index
    %50 = vector.load %arg18[%c0_42, %c0_43] : memref<32x512xbf16, #tpu.memory_space<vmem>>, vector<16x128xbf16>
    tpu.vector_store %arg18[%c0_42, %c0_43], %49 {strides = array<i32>} : memref<32x512xbf16, #tpu.memory_space<vmem>>, vector<16x128xbf16>,
    %c1_44 = arith.constant 1 : index
    %c0_45 = arith.constant 0 : index
    %c0_46 = arith.constant 0 : index
    %51 = vector.load %arg5[%c1_44, %c0_45, %c0_46] : memref<4x16x32xbf16, #tpu.memory_space<vmem>>, vector<1x16x32xbf16>
    %52 = vector.shape_cast %51 : vector<1x16x32xbf16> to vector<16x32xbf16>
    %cst_47 = arith.constant dense<0.000000e+00> : vector<16x128xf32>
    %53 = tpu.matmul %52, %45, %cst_47 {dimension_numbers = #tpu.dot_dimension_numbers<[1], [0], [0], [1], [0, 0, 1, 1], [], []>} : vector<16x32xbf16>, vector<32x128xbf16>, vector<16x128xf32> -> vector<16x128xf32>
    %54 = arith.truncf %53 : vector<16x128xf32> to vector<16x128xbf16>
    %c0_48 = arith.constant 0 : index
    %c128_49 = arith.constant 128 : index
    %55 = vector.load %arg18[%c0_48, %c128_49] : memref<32x512xbf16, #tpu.memory_space<vmem>>, vector<16x128xbf16>
    tpu.vector_store %arg18[%c0_48, %c128_49], %54 {strides = array<i32>} : memref<32x512xbf16, #tpu.memory_space<vmem>>, vector<16x128xbf16>,
    %c2_50 = arith.constant 2 : index
    %c0_51 = arith.constant 0 : index
    %c0_52 = arith.constant 0 : index
    %56 = vector.load %arg5[%c2_50, %c0_51, %c0_52] : memref<4x16x32xbf16, #tpu.memory_space<vmem>>, vector<1x16x32xbf16>
    %57 = vector.shape_cast %56 : vector<1x16x32xbf16> to vector<16x32xbf16>
    %cst_53 = arith.constant dense<0.000000e+00> : vector<16x128xf32>
    %58 = tpu.matmul %57, %45, %cst_53 {dimension_numbers = #tpu.dot_dimension_numbers<[1], [0], [0], [1], [0, 0, 1, 1], [], []>} : vector<16x32xbf16>, vector<32x128xbf16>, vector<16x128xf32> -> vector<16x128xf32>
    %59 = arith.truncf %58 : vector<16x128xf32> to vector<16x128xbf16>
    %c0_54 = arith.constant 0 : index
    %c256_55 = arith.constant 256 : index
    %60 = vector.load %arg18[%c0_54, %c256_55] : memref<32x512xbf16, #tpu.memory_space<vmem>>, vector<16x128xbf16>
    tpu.vector_store %arg18[%c0_54, %c256_55], %59 {strides = array<i32>} : memref<32x512xbf16, #tpu.memory_space<vmem>>, vector<16x128xbf16>,
    %c3_56 = arith.constant 3 : index
    %c0_57 = arith.constant 0 : index
    %c0_58 = arith.constant 0 : index
    %61 = vector.load %arg5[%c3_56, %c0_57, %c0_58] : memref<4x16x32xbf16, #tpu.memory_space<vmem>>, vector<1x16x32xbf16>
    %62 = vector.shape_cast %61 : vector<1x16x32xbf16> to vector<16x32xbf16>
    %cst_59 = arith.constant dense<0.000000e+00> : vector<16x128xf32>
    %63 = tpu.matmul %62, %45, %cst_59 {dimension_numbers = #tpu.dot_dimension_numbers<[1], [0], [0], [1], [0, 0, 1, 1], [], []>} : vector<16x32xbf16>, vector<32x128xbf16>, vector<16x128xf32> -> vector<16x128xf32>
    %64 = arith.truncf %63 : vector<16x128xf32> to vector<16x128xbf16>
    %c0_60 = arith.constant 0 : index
    %c384_61 = arith.constant 384 : index
    %65 = vector.load %arg18[%c0_60, %c384_61] : memref<32x512xbf16, #tpu.memory_space<vmem>>, vector<16x128xbf16>
    tpu.vector_store %arg18[%c0_60, %c384_61], %64 {strides = array<i32>} : memref<32x512xbf16, #tpu.memory_space<vmem>>, vector<16x128xbf16>,
    %c0_62 = arith.constant 0 : index
    %c0_63 = arith.constant 0 : index
    %66 = vector.load %arg18[%c0_62, %c0_63] : memref<32x512xbf16, #tpu.memory_space<vmem>>, vector<16x512xbf16>
    %c0_64 = arith.constant 0 : index
    %c0_65 = arith.constant 0 : index
    %67 = vector.load %arg6[%c0_64, %c0_65] : memref<512x128xbf16, #tpu.memory_space<vmem>>, vector<512x128xbf16>
    %cst_66 = arith.constant dense<0.000000e+00> : vector<16x128xf32>
    %68 = tpu.matmul %66, %67, %cst_66 {dimension_numbers = #tpu.dot_dimension_numbers<[1], [0], [0], [1], [0, 0, 1, 1], [], []>} : vector<16x512xbf16>, vector<512x128xbf16>, vector<16x128xf32> -> vector<16x128xf32>
    %c0_67 = arith.constant 0 : index
    %c0_68 = arith.constant 0 : index
    %69 = vector.load %arg7[%c0_67, %c0_68] : memref<1x128xf32, #tpu.memory_space<vmem>>, vector<1x128xf32>
    %70 = vector.broadcast %69 : vector<1x128xf32> to vector<16x128xf32>
    %71 = arith.addf %68, %70 : vector<16x128xf32>
    %cst_69 = arith.constant 0.000000e+00 : f32
    %72 = vector.broadcast %cst_69 : f32 to vector<16x128xf32>
    %73 = arith.maximumf %71, %72 : vector<16x128xf32>
    %74 = arith.truncf %73 : vector<16x128xf32> to vector<16x128xbf16>
    %c0_70 = arith.constant 0 : index
    %c0_71 = arith.constant 0 : index
    %c0_72 = arith.constant 0 : index
    %75 = vector.load %arg8[%c0_70, %c0_71, %c0_72] : memref<4x8x16xbf16, #tpu.memory_space<vmem>>, vector<1x8x16xbf16>
    %76 = vector.shape_cast %75 : vector<1x8x16xbf16> to vector<8x16xbf16>
    %cst_73 = arith.constant dense<0.000000e+00> : vector<8x128xf32>
    %77 = tpu.matmul %76, %74, %cst_73 {dimension_numbers = #tpu.dot_dimension_numbers<[1], [0], [0], [1], [0, 0, 1, 1], [], []>} : vector<8x16xbf16>, vector<16x128xbf16>, vector<8x128xf32> -> vector<8x128xf32>
    %78 = arith.truncf %77 : vector<8x128xf32> to vector<8x128xbf16>
    %c0_74 = arith.constant 0 : index
    %c0_75 = arith.constant 0 : index
    %79 = vector.load %arg18[%c0_74, %c0_75] : memref<32x512xbf16, #tpu.memory_space<vmem>>, vector<8x128xbf16>
    tpu.vector_store %arg18[%c0_74, %c0_75], %78 {strides = array<i32>} : memref<32x512xbf16, #tpu.memory_space<vmem>>, vector<8x128xbf16>,
    %c1_76 = arith.constant 1 : index
    %c0_77 = arith.constant 0 : index
    %c0_78 = arith.constant 0 : index
    %80 = vector.load %arg8[%c1_76, %c0_77, %c0_78] : memref<4x8x16xbf16, #tpu.memory_space<vmem>>, vector<1x8x16xbf16>
    %81 = vector.shape_cast %80 : vector<1x8x16xbf16> to vector<8x16xbf16>
    %cst_79 = arith.constant dense<0.000000e+00> : vector<8x128xf32>
    %82 = tpu.matmul %81, %74, %cst_79 {dimension_numbers = #tpu.dot_dimension_numbers<[1], [0], [0], [1], [0, 0, 1, 1], [], []>} : vector<8x16xbf16>, vector<16x128xbf16>, vector<8x128xf32> -> vector<8x128xf32>
    %83 = arith.truncf %82 : vector<8x128xf32> to vector<8x128xbf16>
    %c0_80 = arith.constant 0 : index
    %c128_81 = arith.constant 128 : index
    %84 = vector.load %arg18[%c0_80, %c128_81] : memref<32x512xbf16, #tpu.memory_space<vmem>>, vector<8x128xbf16>
    tpu.vector_store %arg18[%c0_80, %c128_81], %83 {strides = array<i32>} : memref<32x512xbf16, #tpu.memory_space<vmem>>, vector<8x128xbf16>,
    %c2_82 = arith.constant 2 : index
    %c0_83 = arith.constant 0 : index
    %c0_84 = arith.constant 0 : index
    %85 = vector.load %arg8[%c2_82, %c0_83, %c0_84] : memref<4x8x16xbf16, #tpu.memory_space<vmem>>, vector<1x8x16xbf16>
    %86 = vector.shape_cast %85 : vector<1x8x16xbf16> to vector<8x16xbf16>
    %cst_85 = arith.constant dense<0.000000e+00> : vector<8x128xf32>
    %87 = tpu.matmul %86, %74, %cst_85 {dimension_numbers = #tpu.dot_dimension_numbers<[1], [0], [0], [1], [0, 0, 1, 1], [], []>} : vector<8x16xbf16>, vector<16x128xbf16>, vector<8x128xf32> -> vector<8x128xf32>
    %88 = arith.truncf %87 : vector<8x128xf32> to vector<8x128xbf16>
    %c0_86 = arith.constant 0 : index
    %c256_87 = arith.constant 256 : index
    %89 = vector.load %arg18[%c0_86, %c256_87] : memref<32x512xbf16, #tpu.memory_space<vmem>>, vector<8x128xbf16>
    tpu.vector_store %arg18[%c0_86, %c256_87], %88 {strides = array<i32>} : memref<32x512xbf16, #tpu.memory_space<vmem>>, vector<8x128xbf16>,
    %c3_88 = arith.constant 3 : index
    %c0_89 = arith.constant 0 : index
    %c0_90 = arith.constant 0 : index
    %90 = vector.load %arg8[%c3_88, %c0_89, %c0_90] : memref<4x8x16xbf16, #tpu.memory_space<vmem>>, vector<1x8x16xbf16>
    %91 = vector.shape_cast %90 : vector<1x8x16xbf16> to vector<8x16xbf16>
    %cst_91 = arith.constant dense<0.000000e+00> : vector<8x128xf32>
    %92 = tpu.matmul %91, %74, %cst_91 {dimension_numbers = #tpu.dot_dimension_numbers<[1], [0], [0], [1], [0, 0, 1, 1], [], []>} : vector<8x16xbf16>, vector<16x128xbf16>, vector<8x128xf32> -> vector<8x128xf32>
    %93 = arith.truncf %92 : vector<8x128xf32> to vector<8x128xbf16>
    %c0_92 = arith.constant 0 : index
    %c384_93 = arith.constant 384 : index
    %94 = vector.load %arg18[%c0_92, %c384_93] : memref<32x512xbf16, #tpu.memory_space<vmem>>, vector<8x128xbf16>
    tpu.vector_store %arg18[%c0_92, %c384_93], %93 {strides = array<i32>} : memref<32x512xbf16, #tpu.memory_space<vmem>>, vector<8x128xbf16>,
    %c0_94 = arith.constant 0 : index
    %c0_95 = arith.constant 0 : index
    %95 = vector.load %arg18[%c0_94, %c0_95] : memref<32x512xbf16, #tpu.memory_space<vmem>>, vector<8x512xbf16>
    %c0_96 = arith.constant 0 : index
    %c0_97 = arith.constant 0 : index
    %96 = vector.load %arg9[%c0_96, %c0_97] : memref<512x128xbf16, #tpu.memory_space<vmem>>, vector<512x128xbf16>
    %cst_98 = arith.constant dense<0.000000e+00> : vector<8x128xf32>
    %97 = tpu.matmul %95, %96, %cst_98 {dimension_numbers = #tpu.dot_dimension_numbers<[1], [0], [0], [1], [0, 0, 1, 1], [], []>} : vector<8x512xbf16>, vector<512x128xbf16>, vector<8x128xf32> -> vector<8x128xf32>
    %c0_99 = arith.constant 0 : index
    %c0_100 = arith.constant 0 : index
    %98 = vector.load %arg10[%c0_99, %c0_100] : memref<1x128xf32, #tpu.memory_space<vmem>>, vector<1x128xf32>
    %99 = vector.broadcast %98 : vector<1x128xf32> to vector<8x128xf32>
    %100 = arith.addf %97, %99 : vector<8x128xf32>
    %cst_101 = arith.constant 0.000000e+00 : f32
    %101 = vector.broadcast %cst_101 : f32 to vector<8x128xf32>
    %102 = arith.maximumf %100, %101 : vector<8x128xf32>
    %103 = arith.truncf %102 : vector<8x128xf32> to vector<8x128xbf16>
    %c0_102 = arith.constant 0 : index
    %c0_103 = arith.constant 0 : index
    %c0_104 = arith.constant 0 : index
    %104 = vector.load %arg11[%c0_102, %c0_103, %c0_104] : memref<4x4x8xbf16, #tpu.memory_space<vmem>>, vector<1x4x8xbf16>
    %105 = vector.shape_cast %104 : vector<1x4x8xbf16> to vector<4x8xbf16>
    %cst_105 = arith.constant dense<0.000000e+00> : vector<4x128xf32>
    %106 = tpu.matmul %105, %103, %cst_105 {dimension_numbers = #tpu.dot_dimension_numbers<[1], [0], [0], [1], [0, 0, 1, 1], [], []>} : vector<4x8xbf16>, vector<8x128xbf16>, vector<4x128xf32> -> vector<4x128xf32>
    %107 = arith.truncf %106 : vector<4x128xf32> to vector<4x128xbf16>
    %c0_106 = arith.constant 0 : index
    %c0_107 = arith.constant 0 : index
    %108 = vector.load %arg18[%c0_106, %c0_107] : memref<32x512xbf16, #tpu.memory_space<vmem>>, vector<4x128xbf16>
    tpu.vector_store %arg18[%c0_106, %c0_107], %107 {strides = array<i32>} : memref<32x512xbf16, #tpu.memory_space<vmem>>, vector<4x128xbf16>,
    %c1_108 = arith.constant 1 : index
    %c0_109 = arith.constant 0 : index
    %c0_110 = arith.constant 0 : index
    %109 = vector.load %arg11[%c1_108, %c0_109, %c0_110] : memref<4x4x8xbf16, #tpu.memory_space<vmem>>, vector<1x4x8xbf16>
    %110 = vector.shape_cast %109 : vector<1x4x8xbf16> to vector<4x8xbf16>
    %cst_111 = arith.constant dense<0.000000e+00> : vector<4x128xf32>
    %111 = tpu.matmul %110, %103, %cst_111 {dimension_numbers = #tpu.dot_dimension_numbers<[1], [0], [0], [1], [0, 0, 1, 1], [], []>} : vector<4x8xbf16>, vector<8x128xbf16>, vector<4x128xf32> -> vector<4x128xf32>
    %112 = arith.truncf %111 : vector<4x128xf32> to vector<4x128xbf16>
    %c0_112 = arith.constant 0 : index
    %c128_113 = arith.constant 128 : index
    %113 = vector.load %arg18[%c0_112, %c128_113] : memref<32x512xbf16, #tpu.memory_space<vmem>>, vector<4x128xbf16>
    tpu.vector_store %arg18[%c0_112, %c128_113], %112 {strides = array<i32>} : memref<32x512xbf16, #tpu.memory_space<vmem>>, vector<4x128xbf16>,
    %c2_114 = arith.constant 2 : index
    %c0_115 = arith.constant 0 : index
    %c0_116 = arith.constant 0 : index
    %114 = vector.load %arg11[%c2_114, %c0_115, %c0_116] : memref<4x4x8xbf16, #tpu.memory_space<vmem>>, vector<1x4x8xbf16>
    %115 = vector.shape_cast %114 : vector<1x4x8xbf16> to vector<4x8xbf16>
    %cst_117 = arith.constant dense<0.000000e+00> : vector<4x128xf32>
    %116 = tpu.matmul %115, %103, %cst_117 {dimension_numbers = #tpu.dot_dimension_numbers<[1], [0], [0], [1], [0, 0, 1, 1], [], []>} : vector<4x8xbf16>, vector<8x128xbf16>, vector<4x128xf32> -> vector<4x128xf32>
    %117 = arith.truncf %116 : vector<4x128xf32> to vector<4x128xbf16>
    %c0_118 = arith.constant 0 : index
    %c256_119 = arith.constant 256 : index
    %118 = vector.load %arg18[%c0_118, %c256_119] : memref<32x512xbf16, #tpu.memory_space<vmem>>, vector<4x128xbf16>
    tpu.vector_store %arg18[%c0_118, %c256_119], %117 {strides = array<i32>} : memref<32x512xbf16, #tpu.memory_space<vmem>>, vector<4x128xbf16>,
    %c3_120 = arith.constant 3 : index
    %c0_121 = arith.constant 0 : index
    %c0_122 = arith.constant 0 : index
    %119 = vector.load %arg11[%c3_120, %c0_121, %c0_122] : memref<4x4x8xbf16, #tpu.memory_space<vmem>>, vector<1x4x8xbf16>
    %120 = vector.shape_cast %119 : vector<1x4x8xbf16> to vector<4x8xbf16>
    %cst_123 = arith.constant dense<0.000000e+00> : vector<4x128xf32>
    %121 = tpu.matmul %120, %103, %cst_123 {dimension_numbers = #tpu.dot_dimension_numbers<[1], [0], [0], [1], [0, 0, 1, 1], [], []>} : vector<4x8xbf16>, vector<8x128xbf16>, vector<4x128xf32> -> vector<4x128xf32>
    %122 = arith.truncf %121 : vector<4x128xf32> to vector<4x128xbf16>
    %c0_124 = arith.constant 0 : index
    %c384_125 = arith.constant 384 : index
    %123 = vector.load %arg18[%c0_124, %c384_125] : memref<32x512xbf16, #tpu.memory_space<vmem>>, vector<4x128xbf16>
    tpu.vector_store %arg18[%c0_124, %c384_125], %122 {strides = array<i32>} : memref<32x512xbf16, #tpu.memory_space<vmem>>, vector<4x128xbf16>,
    %c0_126 = arith.constant 0 : index
    %c0_127 = arith.constant 0 : index
    %124 = vector.load %arg18[%c0_126, %c0_127] : memref<32x512xbf16, #tpu.memory_space<vmem>>, vector<4x512xbf16>
    %c0_128 = arith.constant 0 : index
    %c0_129 = arith.constant 0 : index
    %125 = vector.load %arg12[%c0_128, %c0_129] : memref<512x64xbf16, #tpu.memory_space<vmem>>, vector<512x64xbf16>
    %cst_130 = arith.constant dense<0.000000e+00> : vector<4x64xf32>
    %126 = tpu.matmul %124, %125, %cst_130 {dimension_numbers = #tpu.dot_dimension_numbers<[1], [0], [0], [1], [0, 0, 1, 1], [], []>} : vector<4x512xbf16>, vector<512x64xbf16>, vector<4x64xf32> -> vector<4x64xf32>
    %c0_131 = arith.constant 0 : index
    %c0_132 = arith.constant 0 : index
    %127 = vector.load %arg13[%c0_131, %c0_132] : memref<1x64xf32, #tpu.memory_space<vmem>>, vector<1x64xf32>
    %128 = vector.broadcast %127 : vector<1x64xf32> to vector<4x64xf32>
    %129 = arith.addf %126, %128 : vector<4x64xf32>
    %cst_133 = arith.constant 0.000000e+00 : f32
    %130 = vector.broadcast %cst_133 : f32 to vector<4x64xf32>
    %131 = arith.maximumf %129, %130 : vector<4x64xf32>
    %132 = arith.truncf %131 : vector<4x64xf32> to vector<4x64xbf16>
    %c0_134 = arith.constant 0 : index
    %c0_135 = arith.constant 0 : index
    %133 = vector.load %arg14[%c0_134, %c0_135] : memref<8x4xbf16, #tpu.memory_space<vmem>>, vector<8x4xbf16>
    %cst_136 = arith.constant dense<0.000000e+00> : vector<8x64xf32>
    %134 = tpu.matmul %133, %132, %cst_136 {dimension_numbers = #tpu.dot_dimension_numbers<[1], [0], [0], [1], [0, 0, 1, 1], [], []>} : vector<8x4xbf16>, vector<4x64xbf16>, vector<8x64xf32> -> vector<8x64xf32>
    %135 = arith.truncf %134 : vector<8x64xf32> to vector<8x64xbf16>
    %c0_137 = arith.constant 0 : index
    %c0_138 = arith.constant 0 : index
    %136 = vector.load %arg15[%c0_137, %c0_138] : memref<64x128xbf16, #tpu.memory_space<vmem>>, vector<64x128xbf16>
    %cst_139 = arith.constant dense<0.000000e+00> : vector<8x128xf32>
    %137 = tpu.matmul %135, %136, %cst_139 {dimension_numbers = #tpu.dot_dimension_numbers<[1], [0], [0], [1], [0, 0, 1, 1], [], []>} : vector<8x64xbf16>, vector<64x128xbf16>, vector<8x128xf32> -> vector<8x128xf32>
    %c0_140 = arith.constant 0 : index
    %c0_141 = arith.constant 0 : index
    %138 = vector.load %arg16[%c0_140, %c0_141] : memref<1x128xf32, #tpu.memory_space<vmem>>, vector<1x128xf32>
    %139 = vector.broadcast %138 : vector<1x128xf32> to vector<8x128xf32>
    %140 = arith.addf %137, %139 : vector<8x128xf32>
    %c0_142 = arith.constant 0 : index
    %c0_143 = arith.constant 0 : index
    %141 = vector.load %arg17[%c0_142, %c0_143] : memref<8x128xf32, #tpu.memory_space<vmem>>, vector<8x128xf32>
    tpu.vector_store %arg17[%c0_142, %c0_143], %140 {strides = array<i32>} : memref<8x128xf32, #tpu.memory_space<vmem>>, vector<8x128xf32>,
    return
  }
  func.func @transform_0(%arg0: i32) -> (i32, i32) {
    %c0_i32 = arith.constant 0 : i32
    %c0_i32_0 = arith.constant 0 : i32
    return %arg0, %c0_i32 : i32, i32
  }
  func.func @transform_1(%arg0: i32) -> (i32, i32, i32) {
    %c0_i32 = arith.constant 0 : i32
    %c0_i32_0 = arith.constant 0 : i32
    %c0_i32_1 = arith.constant 0 : i32
    %c0_i32_2 = arith.constant 0 : i32
    return %c0_i32, %c0_i32_0, %c0_i32_1 : i32, i32, i32
  }
  func.func @transform_2(%arg0: i32) -> (i32, i32) {
    %c0_i32 = arith.constant 0 : i32
    %c0_i32_0 = arith.constant 0 : i32
    %c0_i32_1 = arith.constant 0 : i32
    return %c0_i32, %c0_i32_0 : i32, i32
  }
  func.func @transform_3(%arg0: i32) -> (i32, i32) {
    %c0_i32 = arith.constant 0 : i32
    %c0_i32_0 = arith.constant 0 : i32
    %c0_i32_1 = arith.constant 0 : i32
    return %c0_i32, %c0_i32_0 : i32, i32
  }
  func.func @transform_4(%arg0: i32) -> (i32, i32, i32) {
    %c0_i32 = arith.constant 0 : i32
    %c0_i32_0 = arith.constant 0 : i32
    %c0_i32_1 = arith.constant 0 : i32
    %c0_i32_2 = arith.constant 0 : i32
    return %c0_i32, %c0_i32_0, %c0_i32_1 : i32, i32, i32
  }
  func.func @transform_5(%arg0: i32) -> (i32, i32) {
    %c0_i32 = arith.constant 0 : i32
    %c0_i32_0 = arith.constant 0 : i32
    %c0_i32_1 = arith.constant 0 : i32
    return %c0_i32, %c0_i32_0 : i32, i32
  }
  func.func @transform_6(%arg0: i32) -> (i32, i32) {
    %c0_i32 = arith.constant 0 : i32
    %c0_i32_0 = arith.constant 0 : i32
    %c0_i32_1 = arith.constant 0 : i32
    return %c0_i32, %c0_i32_0 : i32, i32
  }
  func.func @transform_7(%arg0: i32) -> (i32, i32, i32) {
    %c0_i32 = arith.constant 0 : i32
    %c0_i32_0 = arith.constant 0 : i32
    %c0_i32_1 = arith.constant 0 : i32
    %c0_i32_2 = arith.constant 0 : i32
    return %c0_i32, %c0_i32_0, %c0_i32_1 : i32, i32, i32
  }
  func.func @transform_8(%arg0: i32) -> (i32, i32) {
    %c0_i32 = arith.constant 0 : i32
    %c0_i32_0 = arith.constant 0 : i32
    %c0_i32_1 = arith.constant 0 : i32
    return %c0_i32, %c0_i32_0 : i32, i32
  }
  func.func @transform_9(%arg0: i32) -> (i32, i32) {
    %c0_i32 = arith.constant 0 : i32
    %c0_i32_0 = arith.constant 0 : i32
    %c0_i32_1 = arith.constant 0 : i32
    return %c0_i32, %c0_i32_0 : i32, i32
  }
  func.func @transform_10(%arg0: i32) -> (i32, i32, i32) {
    %c0_i32 = arith.constant 0 : i32
    %c0_i32_0 = arith.constant 0 : i32
    %c0_i32_1 = arith.constant 0 : i32
    %c0_i32_2 = arith.constant 0 : i32
    return %c0_i32, %c0_i32_0, %c0_i32_1 : i32, i32, i32
  }
  func.func @transform_11(%arg0: i32) -> (i32, i32) {
    %c0_i32 = arith.constant 0 : i32
    %c0_i32_0 = arith.constant 0 : i32
    %c0_i32_1 = arith.constant 0 : i32
    return %c0_i32, %c0_i32_0 : i32, i32
  }
  func.func @transform_12(%arg0: i32) -> (i32, i32) {
    %c0_i32 = arith.constant 0 : i32
    %c0_i32_0 = arith.constant 0 : i32
    %c0_i32_1 = arith.constant 0 : i32
    return %c0_i32, %c0_i32_0 : i32, i32
  }
  func.func @transform_13(%arg0: i32) -> (i32, i32) {
    %c0_i32 = arith.constant 0 : i32
    %c0_i32_0 = arith.constant 0 : i32
    %c0_i32_1 = arith.constant 0 : i32
    return %c0_i32, %c0_i32_0 : i32, i32
  }
  func.func @transform_14(%arg0: i32) -> (i32, i32) {
    %c0_i32 = arith.constant 0 : i32
    %c0_i32_0 = arith.constant 0 : i32
    %c0_i32_1 = arith.constant 0 : i32
    return %c0_i32, %c0_i32_0 : i32, i32
  }
  func.func @transform_15(%arg0: i32) -> (i32, i32) {
    %c0_i32 = arith.constant 0 : i32
    %c0_i32_0 = arith.constant 0 : i32
    %c0_i32_1 = arith.constant 0 : i32
    return %c0_i32, %c0_i32_0 : i32, i32
  }
  func.func @transform_16(%arg0: i32) -> (i32, i32) {
    %c0_i32 = arith.constant 0 : i32
    %c0_i32_0 = arith.constant 0 : i32
    return %arg0, %c0_i32 : i32, i32
  }
}

</mosaic_0001>

<llo_original>
// kernel: encode.1
$region0: #{encode.1}
  #allocation0 [shape = 'u32[]', space=smem, size = 0x4, offset = 0x4, fixed_abs, tag = 'smem constant byte address 0x4 - core index']
  #allocation1 [shape = 'u32[72,128]{1,0:T(1,128)}', space=vmem, size = 0x9000, scoped, tag = 'internal scratch']
  #allocation2 [shape = 'bf16[32,512]{1,0:T(8,128)(2,1)}', space=vmem, size = 0x8000, scoped, tag = 'scratch operand']
  %s0 = inlined_call_operand.vmem [shape: f32[32,64], index: 0, kind: input, shape index: {}]
  %s1 = inlined_call_operand.hbm [shape: bf16[7,32,32], index: 1, kind: input, shape index: {}]
  %s2 = inlined_call_operand.hbm [shape: bf16[448,128], index: 2, kind: input, shape index: {}]
  %s3 = inlined_call_operand.hbm [shape: f32[1,128], index: 3, kind: input, shape index: {}]
  %s4 = inlined_call_operand.hbm [shape: bf16[4,16,32], index: 4, kind: input, shape index: {}]
  %s5 = inlined_call_operand.hbm [shape: bf16[512,128], index: 5, kind: input, shape index: {}]
  %s6 = inlined_call_operand.hbm [shape: f32[1,128], index: 6, kind: input, shape index: {}]
  %s7 = inlined_call_operand.hbm [shape: bf16[4,8,16], index: 7, kind: input, shape index: {}]
  %s8 = inlined_call_operand.vmem [shape: bf16[512,128], index: 8, kind: input, shape index: {}]
  %s9 = inlined_call_operand.hbm [shape: f32[1,128], index: 9, kind: input, shape index: {}]
  %s10 = inlined_call_operand.hbm [shape: bf16[4,4,8], index: 10, kind: input, shape index: {}]
  %s11 = inlined_call_operand.vmem [shape: bf16[512,64], index: 11, kind: input, shape index: {}]
  %s12 = inlined_call_operand.vmem [shape: f32[1,64], index: 12, kind: input, shape index: {}]
  %s13 = inlined_call_operand.vmem [shape: bf16[8,4], index: 13, kind: input, shape index: {}]
  %s14 = inlined_call_operand.vmem [shape: bf16[64,128], index: 14, kind: input, shape index: {}]
  %s15 = inlined_call_operand.vmem [shape: f32[1,128], index: 15, kind: input, shape index: {}]
  %s16 = inlined_call_operand.vmem [shape: f32[8,128], index: 16, kind: output, shape index: {}]
  %s17 = sld [smem:[#allocation0]]
  $region110: #{encode.1} parent=0
    _
  %s19 = ssub.s32 1, %s17
  %s20 = scalar_select 0, %s19, %s17
  $region1: #{encode.1} parent=0
    #allocation3 [shape = 'u8[57344]{0}', space=vmem, size = 0xe000, scoped, tag = 'input window, operand 1, single buffered']
    #allocation4 [shape = 's32[1]{0}', space=sflag, size = 0x4, scoped, tag = 'scoped memory for encode.1']
    #allocation5 [shape = 'u8[114688]{0}', space=vmem, size = 0x1c000, scoped, tag = 'input window, operand 2, single buffered']
    #allocation6 [shape = 's32[1]{0}', space=sflag, size = 0x4, scoped, tag = 'scoped memory for encode.1']
    #allocation7 [shape = 'u8[512]{0}', space=vmem, size = 0x400, scoped, tag = 'input window, operand 3, single buffered']
    #allocation8 [shape = 'u8[16384]{0}', space=vmem, size = 0x4000, scoped, tag = 'input window, operand 4, single buffered']
    #allocation9 [shape = 's32[1]{0}', space=sflag, size = 0x4, scoped, tag = 'scoped memory for encode.1']
    #allocation10 [shape = 'u8[131072]{0}', space=vmem, size = 0x20000, scoped, tag = 'input window, operand 5, single buffered']
    #allocation11 [shape = 'u8[512]{0}', space=vmem, size = 0x400, scoped, tag = 'input window, operand 6, single buffered']
    #allocation12 [shape = 's32[1]{0}', space=sflag, size = 0x4, scoped, tag = 'scoped memory for encode.1']
    #allocation13 [shape = 'u8[8192]{0}', space=vmem, size = 0x2000, scoped, tag = 'input window, operand 7, single buffered']
    #allocation14 [shape = 'u8[512]{0}', space=vmem, size = 0x400, scoped, tag = 'input window, operand 9, single buffered']
    #allocation15 [shape = 's32[1]{0}', space=sflag, size = 0x4, scoped, tag = 'scoped memory for encode.1']
    #allocation16 [shape = 'u8[4096]{0}', space=vmem, size = 0x1000, scoped, tag = 'input window, operand 10, single buffered']
    %21 = vsyncpa [#allocation4], 0
    %22 = vsyncpa [#allocation6], 0
    %23 = vsyncpa [#allocation9], 0
    %24 = vsyncpa [#allocation12], 0
    %25 = vsyncpa [#allocation15], 0
    // Predicated region
    $region2: #{encode.1} parent=1 // pred_check
      _
    $region3: #{encode.1} parent=1 // pred_check_branch
      %27 = sbr.rel (0) target = $region5
    $region4: #{encode.1} parent=1 // pred_region
      _
    $region5: #{encode.1} parent=1 // pred_fallthru
      _
    // Predicated region
    $region6: #{encode.1} parent=1 // pred_check
      _
    $region7: #{encode.1} parent=1 // pred_check_branch
      %29 = sbr.rel (0) target = $region9
    $region8: #{encode.1} parent=1 // pred_region
      %31 = vsyncadd [#allocation4], 0
      %s32 = sshll.u32 %s1, 4
      %s33 = int_to_ptr.hbm [resolvable:$true] %s32
      %s34 = sshll.u32 [#allocation3], 4
      %s35 = int_to_ptr.vmem [resolvable:$true] %s34
      %40 = dma.hbm_to_vmem [thread:$0]  %s33, 1792, %s35, [#allocation4], 64, 64, 4
    $region9: #{encode.1} parent=1 // pred_fallthru
      _
    // Predicated region
    $region10: #{encode.1} parent=1 // pred_check
      _
    $region11: #{encode.1} parent=1 // pred_check_branch
      %42 = sbr.rel (0) target = $region13
    $region12: #{encode.1} parent=1 // pred_region
      %44 = vsyncadd [#allocation6], 0
      %s45 = sshll.u32 %s2, 4
      %s46 = int_to_ptr.hbm [resolvable:$true] %s45
      %s47 = sshll.u32 [#allocation5], 4
      %s48 = int_to_ptr.vmem [resolvable:$true] %s47
      %53 = dma.hbm_to_vmem [thread:$0]  %s46, 3584, %s48, [#allocation6], 64, 64, 4
    $region13: #{encode.1} parent=1 // pred_fallthru
      _
    // Predicated region
    $region14: #{encode.1} parent=1 // pred_check
      _
    $region15: #{encode.1} parent=1 // pred_check_branch
      %55 = sbr.rel (0) target = $region17
    $region16: #{encode.1} parent=1 // pred_region
      %57 = vsyncadd [#allocation6], 0
      %s59 = sshll.u32 %s3, 4
      %s60 = int_to_ptr.hbm [resolvable:$true] %s59
      %s61 = sshll.u32 [#allocation7], 4
      %s62 = int_to_ptr.vmem [resolvable:$true] %s61
      %64 = dma.hbm_to_vmem [thread:$0]  %s60, 16, %s62, [#allocation6]
    $region17: #{encode.1} parent=1 // pred_fallthru
      _
    // Predicated region
    $region18: #{encode.1} parent=1 // pred_check
      _
    $region19: #{encode.1} parent=1 // pred_check_branch
      %66 = sbr.rel (0) target = $region21
    $region20: #{encode.1} parent=1 // pred_region
      %68 = vsyncadd [#allocation9], 0
      %s69 = sshll.u32 %s4, 4
      %s70 = int_to_ptr.hbm [resolvable:$true] %s69
      %s71 = sshll.u32 [#allocation8], 4
      %s72 = int_to_ptr.vmem [resolvable:$true] %s71
      %77 = dma.hbm_to_vmem [thread:$0]  %s70, 512, %s72, [#allocation9], 64, 64, 4
    $region21: #{encode.1} parent=1 // pred_fallthru
      _
    // Predicated region
    $region22: #{encode.1} parent=1 // pred_check
      _
    $region23: #{encode.1} parent=1 // pred_check_branch
      %79 = sbr.rel (0) target = $region25
    $region24: #{encode.1} parent=1 // pred_region
      %81 = vsyncadd [#allocation9], 0
      %s82 = sshll.u32 %s5, 4
      %s83 = int_to_ptr.hbm [resolvable:$true] %s82
      %s84 = sshll.u32 [#allocation10], 4
      %s85 = int_to_ptr.vmem [resolvable:$true] %s84
      %90 = dma.hbm_to_vmem [thread:$0]  %s83, 4096, %s85, [#allocation9], 64, 64, 4
    $region25: #{encode.1} parent=1 // pred_fallthru
      _
    // Predicated region
    $region26: #{encode.1} parent=1 // pred_check
      _
    $region27: #{encode.1} parent=1 // pred_check_branch
      %92 = sbr.rel (0) target = $region29
    $region28: #{encode.1} parent=1 // pred_region
      %94 = vsyncadd [#allocation12], 0
      %s96 = sshll.u32 %s6, 4
      %s97 = int_to_ptr.hbm [resolvable:$true] %s96
      %s98 = sshll.u32 [#allocation11], 4
      %s99 = int_to_ptr.vmem [resolvable:$true] %s98
      %101 = dma.hbm_to_vmem [thread:$0]  %s97, 16, %s99, [#allocation12]
    $region29: #{encode.1} parent=1 // pred_fallthru
      _
    // Predicated region
    $region30: #{encode.1} parent=1 // pred_check
      _
    $region31: #{encode.1} parent=1 // pred_check_branch
      %103 = sbr.rel (0) target = $region33
    $region32: #{encode.1} parent=1 // pred_region
      %105 = vsyncadd [#allocation12], 0
      %s106 = sshll.u32 %s7, 4
      %s107 = int_to_ptr.hbm [resolvable:$true] %s106
      %s108 = sshll.u32 [#allocation13], 4
      %s109 = int_to_ptr.vmem [resolvable:$true] %s108
      %114 = dma.hbm_to_vmem [thread:$0]  %s107, 256, %s109, [#allocation12], 64, 64, 4
    $region33: #{encode.1} parent=1 // pred_fallthru
      _
    // Predicated region
    $region34: #{encode.1} parent=1 // pred_check
      _
    $region35: #{encode.1} parent=1 // pred_check_branch
      %116 = sbr.rel (0) target = $region37
    $region36: #{encode.1} parent=1 // pred_region
      _
    $region37: #{encode.1} parent=1 // pred_fallthru
      _
    // Predicated region
    $region38: #{encode.1} parent=1 // pred_check
      _
    $region39: #{encode.1} parent=1 // pred_check_branch
      %118 = sbr.rel (0) target = $region41
    $region40: #{encode.1} parent=1 // pred_region
      %120 = vsyncadd [#allocation15], 0
      %s122 = sshll.u32 %s9, 4
      %s123 = int_to_ptr.hbm [resolvable:$true] %s122
      %s124 = sshll.u32 [#allocation14], 4
      %s125 = int_to_ptr.vmem [resolvable:$true] %s124
      %127 = dma.hbm_to_vmem [thread:$0]  %s123, 16, %s125, [#allocation15]
    $region41: #{encode.1} parent=1 // pred_fallthru
      _
    // Predicated region
    $region42: #{encode.1} parent=1 // pred_check
      _
    $region43: #{encode.1} parent=1 // pred_check_branch
      %129 = sbr.rel (0) target = $region45
    $region44: #{encode.1} parent=1 // pred_region
      %131 = vsyncadd [#allocation15], 0
      %s132 = sshll.u32 %s10, 4
      %s133 = int_to_ptr.hbm [resolvable:$true] %s132
      %s134 = sshll.u32 [#allocation16], 4
      %s135 = int_to_ptr.vmem [resolvable:$true] %s134
      %140 = dma.hbm_to_vmem [thread:$0]  %s133, 128, %s135, [#allocation15], 32, 32, 2
    $region45: #{encode.1} parent=1 // pred_fallthru
      _
    // Predicated region
    $region46: #{encode.1} parent=1 // pred_check
      _
    $region47: #{encode.1} parent=1 // pred_check_branch
      %142 = sbr.rel (0) target = $region49
    $region48: #{encode.1} parent=1 // pred_region
      _
    $region49: #{encode.1} parent=1 // pred_fallthru
      _
    // Predicated region
    $region50: #{encode.1} parent=1 // pred_check
      _
    $region51: #{encode.1} parent=1 // pred_check_branch
      %144 = sbr.rel (0) target = $region53
    $region52: #{encode.1} parent=1 // pred_region
      _
    $region53: #{encode.1} parent=1 // pred_fallthru
      _
    // Predicated region
    $region54: #{encode.1} parent=1 // pred_check
      _
    $region55: #{encode.1} parent=1 // pred_check_branch
      %146 = sbr.rel (0) target = $region57
    $region56: #{encode.1} parent=1 // pred_region
      _
    $region57: #{encode.1} parent=1 // pred_fallthru
      _
    // Predicated region
    $region58: #{encode.1} parent=1 // pred_check
      _
    $region59: #{encode.1} parent=1 // pred_check_branch
      %148 = sbr.rel (0) target = $region61
    $region60: #{encode.1} parent=1 // pred_region
      _
    $region61: #{encode.1} parent=1 // pred_fallthru
      _
    // Predicated region
    $region62: #{encode.1} parent=1 // pred_check
      _
    $region63: #{encode.1} parent=1 // pred_check_branch
      %150 = sbr.rel (0) target = $region65
    $region64: #{encode.1} parent=1 // pred_region
      _
    $region65: #{encode.1} parent=1 // pred_fallthru
      _
    // Predicated region
    $region66: #{encode.1} parent=1 // pred_check
      _
    $region67: #{encode.1} parent=1 // pred_check_branch
      %152 = sbr.rel (0) target = $region69
    $region68: #{encode.1} parent=1 // pred_region
      %154 = dma.done [#allocation4], 1792
    $region69: #{encode.1} parent=1 // pred_fallthru
      _
    // Predicated region
    $region70: #{encode.1} parent=1 // pred_check
      _
    $region71: #{encode.1} parent=1 // pred_check_branch
      %156 = sbr.rel (0) target = $region73
    $region72: #{encode.1} parent=1 // pred_region
      %158 = dma.done [#allocation6], 3584
    $region73: #{encode.1} parent=1 // pred_fallthru
      _
    // Predicated region
    $region74: #{encode.1} parent=1 // pred_check
      _
    $region75: #{encode.1} parent=1 // pred_check_branch
      %160 = sbr.rel (0) target = $region77
    $region76: #{encode.1} parent=1 // pred_region
      %162 = dma.done [#allocation6], 16
    $region77: #{encode.1} parent=1 // pred_fallthru
      _
    // Predicated region
    $region78: #{encode.1} parent=1 // pred_check
      _
    $region79: #{encode.1} parent=1 // pred_check_branch
      %164 = sbr.rel (0) target = $region81
    $region80: #{encode.1} parent=1 // pred_region
      %166 = dma.done [#allocation9], 512
    $region81: #{encode.1} parent=1 // pred_fallthru
      _
    // Predicated region
    $region82: #{encode.1} parent=1 // pred_check
      _
    $region83: #{encode.1} parent=1 // pred_check_branch
      %168 = sbr.rel (0) target = $region85
    $region84: #{encode.1} parent=1 // pred_region
      %170 = dma.done [#allocation9], 4096
    $region85: #{encode.1} parent=1 // pred_fallthru
      _
    // Predicated region
    $region86: #{encode.1} parent=1 // pred_check
      _
    $region87: #{encode.1} parent=1 // pred_check_branch
      %172 = sbr.rel (0) target = $region89
    $region88: #{encode.1} parent=1 // pred_region
      %174 = dma.done [#allocation12], 16
    $region89: #{encode.1} parent=1 // pred_fallthru
      _
    // Predicated region
    $region90: #{encode.1} parent=1 // pred_check
      _
    $region91: #{encode.1} parent=1 // pred_check_branch
      %176 = sbr.rel (0) target = $region93
    $region92: #{encode.1} parent=1 // pred_region
      %178 = dma.done [#allocation12], 256
    $region93: #{encode.1} parent=1 // pred_fallthru
      _
    // Predicated region
    $region94: #{encode.1} parent=1 // pred_check
      _
    $region95: #{encode.1} parent=1 // pred_check_branch
      %180 = sbr.rel (0) target = $region97
    $region96: #{encode.1} parent=1 // pred_region
      %182 = dma.done [#allocation15], 16
    $region97: #{encode.1} parent=1 // pred_fallthru
      _
    // Predicated region
    $region98: #{encode.1} parent=1 // pred_check
      _
    $region99: #{encode.1} parent=1 // pred_check_branch
      %184 = sbr.rel (0) target = $region101
    $region100: #{encode.1} parent=1 // pred_region
      %186 = dma.done [#allocation15], 128
    $region101: #{encode.1} parent=1 // pred_fallthru
      _
    %v188 = vld [vmem:[%s0] sm:$0xff]
    %v189 = vld [vmem:[%s0 + $0x8] sm:$0xff]
    %v190 = vld [vmem:[%s0 + $0x10] sm:$0xff]
    %v191 = vld [vmem:[%s0 + $0x18] sm:$0xff]
    %v192 = vpack.c.bf16 %v189, %v188
    %v193 = vpack.c.bf16 %v191, %v190
    %v194 = vld [vmem:[#allocation3] sm:$0xf]
    %v195 = vld [vmem:[#allocation3 + $0x4] sm:$0xf]
    %v196 = vld [vmem:[#allocation3 + $0x8] sm:$0xf]
    %v197 = vld [vmem:[#allocation3 + $0xc] sm:$0xf]
    %v202 = vunpack.c.l.b16 %v194
    %v203 = vunpack.c.l.b16 %v195
    %v204 = vunpack.c.l.b16 %v196
    %v205 = vunpack.c.l.b16 %v197
    %v206 = vpack.c.b16 %v203, %v202
    %v207 = vpack.c.b16 %v205, %v204
    %vm208 = vcmask 261120
    %v210 = vsel %vm208, %v206, 0
    %v213 = vsel %vm208, %v207, 0
    %215 = vmatpush.bf16.msra.mxu0 0
    %216 = vmatpush.bf16.msra.mxu0 0
    %217 = vmatpush.bf16.msra.mxu0 0
    %218 = vmatpush.bf16.msra.mxu0 0
    %219 = vmatpush.bf16.msra.mxu0 0
    %220 = vmatpush.bf16.msra.mxu0 0
    %221 = vmatpush.bf16.msra.mxu0 %v193
    %222 = vmatpush.bf16.msra.mxu0 %v192
    %223 = vmatmul.bf16.gmra.mxu0 %v210
    %v224 = vpop.f32.mrf.mxu0
    %v225 = vadd.f32 0.0, %v224
    %v226 = vpop.f32.mrf.mxu0
    %v227 = vadd.f32 0.0, %v226
    %228 = vmatmul.bf16.gmra.mxu0 %v213
    %v229 = vpop.f32.mrf.mxu0
    %v230 = vadd.f32 0.0, %v229
    %v231 = vpop.f32.mrf.mxu0
    %v232 = vadd.f32 0.0, %v231
    %233 = vdwg.mxu0
    %v234 = vpack.c.bf16 %v225, %v225
    %v235 = vpack.c.bf16 %v227, %v227
    %v236 = vpack.c.bf16 %v230, %v230
    %v237 = vpack.c.bf16 %v232, %v232
    %vm238 = vcmask 519168
    %239 = vst.msk [vmem:[#allocation2] sm:$0xf] %vm238, %v234
    %240 = vst.msk [vmem:[#allocation2 + $0x10] sm:$0xf] %vm238, %v235
    %241 = vst.msk [vmem:[#allocation2 + $0x20] sm:$0xf] %vm238, %v236
    %242 = vst.msk [vmem:[#allocation2 + $0x30] sm:$0xf] %vm238, %v237
    %s243 = scalar_lea.vmem [#allocation3], 16
    %v244 = vld [vmem:[%s243] sm:$0xf]
    %v245 = vld [vmem:[%s243 + $0x4] sm:$0xf]
    %v246 = vld [vmem:[%s243 + $0x8] sm:$0xf]
    %v247 = vld [vmem:[%s243 + $0xc] sm:$0xf]
    %v252 = vunpack.c.l.b16 %v244
    %v253 = vunpack.c.l.b16 %v245
    %v254 = vunpack.c.l.b16 %v246
    %v255 = vunpack.c.l.b16 %v247
    %v256 = vpack.c.b16 %v253, %v252
    %v257 = vpack.c.b16 %v255, %v254
    %v259 = vsel %vm208, %v256, 0
    %v262 = vsel %vm208, %v257, 0
    %264 = vmatpush.bf16.msra.mxu0 0
    %265 = vmatpush.bf16.msra.mxu0 0
    %266 = vmatpush.bf16.msra.mxu0 0
    %267 = vmatpush.bf16.msra.mxu0 0
    %268 = vmatpush.bf16.msra.mxu0 0
    %269 = vmatpush.bf16.msra.mxu0 0
    %270 = vmatpush.bf16.msra.mxu0 %v193
    %271 = vmatpush.bf16.msra.mxu0 %v192
    %272 = vmatmul.bf16.gmra.mxu0 %v259
    %v273 = vpop.f32.mrf.mxu0
    %v274 = vadd.f32 0.0, %v273
    %v275 = vpop.f32.mrf.mxu0
    %v276 = vadd.f32 0.0, %v275
    %277 = vmatmul.bf16.gmra.mxu0 %v262
    %v278 = vpop.f32.mrf.mxu0
    %v279 = vadd.f32 0.0, %v278
    %v280 = vpop.f32.mrf.mxu0
    %v281 = vadd.f32 0.0, %v280
    %282 = vdwg.mxu0
    %v283 = vpack.c.bf16 %v274, %v274
    %v284 = vpack.c.bf16 %v276, %v276
    %v285 = vpack.c.bf16 %v279, %v279
    %v286 = vpack.c.bf16 %v281, %v281
    %291 = vrot.lane.b32.xlu0 %v283, 64
    %v292 = vpop.permute.xlu0 %291
    %293 = vrot.lane.b32.xlu0 %v284, 64
    %v294 = vpop.permute.xlu0 %293
    %295 = vrot.lane.b32.xlu0 %v285, 64
    %v296 = vpop.permute.xlu0 %295
    %297 = vrot.lane.b32.xlu0 %v286, 64
    %v298 = vpop.permute.xlu0 %297
    %vm303 = vcmask 1043968
    %304 = vst.msk [vmem:[#allocation2] sm:$0xf] %vm303, %v292
    %305 = vst.msk [vmem:[#allocation2 + $0x10] sm:$0xf] %vm303, %v294
    %306 = vst.msk [vmem:[#allocation2 + $0x20] sm:$0xf] %vm303, %v296
    %307 = vst.msk [vmem:[#allocation2 + $0x30] sm:$0xf] %vm303, %v298
    %s308 = scalar_lea.vmem [#allocation3], 32
    %v309 = vld [vmem:[%s308] sm:$0xf]
    %v310 = vld [vmem:[%s308 + $0x4] sm:$0xf]
    %v311 = vld [vmem:[%s308 + $0x8] sm:$0xf]
    %v312 = vld [vmem:[%s308 + $0xc] sm:$0xf]
    %v317 = vunpack.c.l.b16 %v309
    %v318 = vunpack.c.l.b16 %v310
    %v319 = vunpack.c.l.b16 %v311
    %v320 = vunpack.c.l.b16 %v312
    %v321 = vpack.c.b16 %v318, %v317
    %v322 = vpack.c.b16 %v320, %v319
    %v324 = vsel %vm208, %v321, 0
    %v327 = vsel %vm208, %v322, 0
    %329 = vmatpush.bf16.msra.mxu0 0
    %330 = vmatpush.bf16.msra.mxu0 0
    %331 = vmatpush.bf16.msra.mxu0 0
    %332 = vmatpush.bf16.msra.mxu0 0
    %333 = vmatpush.bf16.msra.mxu0 0
    %334 = vmatpush.bf16.msra.mxu0 0
    %335 = vmatpush.bf16.msra.mxu0 %v193
    %336 = vmatpush.bf16.msra.mxu0 %v192
    %337 = vmatmul.bf16.gmra.mxu0 %v324
    %v338 = vpop.f32.mrf.mxu0
    %v339 = vadd.f32 0.0, %v338
    %v340 = vpop.f32.mrf.mxu0
    %v341 = vadd.f32 0.0, %v340
    %342 = vmatmul.bf16.gmra.mxu0 %v327
    %v343 = vpop.f32.mrf.mxu0
    %v344 = vadd.f32 0.0, %v343
    %v345 = vpop.f32.mrf.mxu0
    %v346 = vadd.f32 0.0, %v345
    %347 = vdwg.mxu0
    %v348 = vpack.c.bf16 %v339, %v339
    %v349 = vpack.c.bf16 %v341, %v341
    %v350 = vpack.c.bf16 %v344, %v344
    %v351 = vpack.c.bf16 %v346, %v346
    %352 = vst.msk [vmem:[#allocation2 + $0x4] sm:$0xf] %vm238, %v348
    %353 = vst.msk [vmem:[#allocation2 + $0x14] sm:$0xf] %vm238, %v349
    %354 = vst.msk [vmem:[#allocation2 + $0x24] sm:$0xf] %vm238, %v350
    %355 = vst.msk [vmem:[#allocation2 + $0x34] sm:$0xf] %vm238, %v351
    %s356 = scalar_lea.vmem [#allocation3], 48
    %v357 = vld [vmem:[%s356] sm:$0xf]
    %v358 = vld [vmem:[%s356 + $0x4] sm:$0xf]
    %v359 = vld [vmem:[%s356 + $0x8] sm:$0xf]
    %v360 = vld [vmem:[%s356 + $0xc] sm:$0xf]
    %v365 = vunpack.c.l.b16 %v357
    %v366 = vunpack.c.l.b16 %v358
    %v367 = vunpack.c.l.b16 %v359
    %v368 = vunpack.c.l.b16 %v360
    %v369 = vpack.c.b16 %v366, %v365
    %v370 = vpack.c.b16 %v368, %v367
    %v372 = vsel %vm208, %v369, 0
    %v375 = vsel %vm208, %v370, 0
    %377 = vmatpush.bf16.msra.mxu0 0
    %378 = vmatpush.bf16.msra.mxu0 0
    %379 = vmatpush.bf16.msra.mxu0 0
    %380 = vmatpush.bf16.msra.mxu0 0
    %381 = vmatpush.bf16.msra.mxu0 0
    %382 = vmatpush.bf16.msra.mxu0 0
    %383 = vmatpush.bf16.msra.mxu0 %v193
    %384 = vmatpush.bf16.msra.mxu0 %v192
    %385 = vmatmul.bf16.gmra.mxu0 %v372
    %v386 = vpop.f32.mrf.mxu0
    %v387 = vadd.f32 0.0, %v386
    %v388 = vpop.f32.mrf.mxu0
    %v389 = vadd.f32 0.0, %v388
    %390 = vmatmul.bf16.gmra.mxu0 %v375
    %v391 = vpop.f32.mrf.mxu0
    %v392 = vadd.f32 0.0, %v391
    %v393 = vpop.f32.mrf.mxu0
    %v394 = vadd.f32 0.0, %v393
    %395 = vdwg.mxu0
    %v396 = vpack.c.bf16 %v387, %v387
    %v397 = vpack.c.bf16 %v389, %v389
    %v398 = vpack.c.bf16 %v392, %v392
    %v399 = vpack.c.bf16 %v394, %v394
    %404 = vrot.lane.b32.xlu0 %v396, 64
    %v405 = vpop.permute.xlu0 %404
    %406 = vrot.lane.b32.xlu0 %v397, 64
    %v407 = vpop.permute.xlu0 %406
    %408 = vrot.lane.b32.xlu0 %v398, 64
    %v409 = vpop.permute.xlu0 %408
    %410 = vrot.lane.b32.xlu0 %v399, 64
    %v411 = vpop.permute.xlu0 %410
    %416 = vst.msk [vmem:[#allocation2 + $0x4] sm:$0xf] %vm303, %v405
    %417 = vst.msk [vmem:[#allocation2 + $0x14] sm:$0xf] %vm303, %v407
    %418 = vst.msk [vmem:[#allocation2 + $0x24] sm:$0xf] %vm303, %v409
    %419 = vst.msk [vmem:[#allocation2 + $0x34] sm:$0xf] %vm303, %v411
    %s420 = scalar_lea.vmem [#allocation3], 64
    %v421 = vld [vmem:[%s420] sm:$0xf]
    %v422 = vld [vmem:[%s420 + $0x4] sm:$0xf]
    %v423 = vld [vmem:[%s420 + $0x8] sm:$0xf]
    %v424 = vld [vmem:[%s420 + $0xc] sm:$0xf]
    %v429 = vunpack.c.l.b16 %v421
    %v430 = vunpack.c.l.b16 %v422
    %v431 = vunpack.c.l.b16 %v423
    %v432 = vunpack.c.l.b16 %v424
    %v433 = vpack.c.b16 %v430, %v429
    %v434 = vpack.c.b16 %v432, %v431
    %v436 = vsel %vm208, %v433, 0
    %v439 = vsel %vm208, %v434, 0
    %441 = vmatpush.bf16.msra.mxu0 0
    %442 = vmatpush.bf16.msra.mxu0 0
    %443 = vmatpush.bf16.msra.mxu0 0
    %444 = vmatpush.bf16.msra.mxu0 0
    %445 = vmatpush.bf16.msra.mxu0 0
    %446 = vmatpush.bf16.msra.mxu0 0
    %447 = vmatpush.bf16.msra.mxu0 %v193
    %448 = vmatpush.bf16.msra.mxu0 %v192
    %449 = vmatmul.bf16.gmra.mxu0 %v436
    %v450 = vpop.f32.mrf.mxu0
    %v451 = vadd.f32 0.0, %v450
    %v452 = vpop.f32.mrf.mxu0
    %v453 = vadd.f32 0.0, %v452
    %454 = vmatmul.bf16.gmra.mxu0 %v439
    %v455 = vpop.f32.mrf.mxu0
    %v456 = vadd.f32 0.0, %v455
    %v457 = vpop.f32.mrf.mxu0
    %v458 = vadd.f32 0.0, %v457
    %459 = vdwg.mxu0
    %v460 = vpack.c.bf16 %v451, %v451
    %v461 = vpack.c.bf16 %v453, %v453
    %v462 = vpack.c.bf16 %v456, %v456
    %v463 = vpack.c.bf16 %v458, %v458
    %464 = vst.msk [vmem:[#allocation2 + $0x8] sm:$0xf] %vm238, %v460
    %465 = vst.msk [vmem:[#allocation2 + $0x18] sm:$0xf] %vm238, %v461
    %466 = vst.msk [vmem:[#allocation2 + $0x28] sm:$0xf] %vm238, %v462
    %467 = vst.msk [vmem:[#allocation2 + $0x38] sm:$0xf] %vm238, %v463
    %s468 = scalar_lea.vmem [#allocation3], 80
    %v469 = vld [vmem:[%s468] sm:$0xf]
    %v470 = vld [vmem:[%s468 + $0x4] sm:$0xf]
    %v471 = vld [vmem:[%s468 + $0x8] sm:$0xf]
    %v472 = vld [vmem:[%s468 + $0xc] sm:$0xf]
    %v477 = vunpack.c.l.b16 %v469
    %v478 = vunpack.c.l.b16 %v470
    %v479 = vunpack.c.l.b16 %v471
    %v480 = vunpack.c.l.b16 %v472
    %v481 = vpack.c.b16 %v478, %v477
    %v482 = vpack.c.b16 %v480, %v479
    %v484 = vsel %vm208, %v481, 0
    %v487 = vsel %vm208, %v482, 0
    %489 = vmatpush.bf16.msra.mxu0 0
    %490 = vmatpush.bf16.msra.mxu0 0
    %491 = vmatpush.bf16.msra.mxu0 0
    %492 = vmatpush.bf16.msra.mxu0 0
    %493 = vmatpush.bf16.msra.mxu0 0
    %494 = vmatpush.bf16.msra.mxu0 0
    %495 = vmatpush.bf16.msra.mxu0 %v193
    %496 = vmatpush.bf16.msra.mxu0 %v192
    %497 = vmatmul.bf16.gmra.mxu0 %v484
    %v498 = vpop.f32.mrf.mxu0
    %v499 = vadd.f32 0.0, %v498
    %v500 = vpop.f32.mrf.mxu0
    %v501 = vadd.f32 0.0, %v500
    %502 = vmatmul.bf16.gmra.mxu0 %v487
    %v503 = vpop.f32.mrf.mxu0
    %v504 = vadd.f32 0.0, %v503
    %v505 = vpop.f32.mrf.mxu0
    %v506 = vadd.f32 0.0, %v505
    %507 = vdwg.mxu0
    %v508 = vpack.c.bf16 %v499, %v499
    %v509 = vpack.c.bf16 %v501, %v501
    %v510 = vpack.c.bf16 %v504, %v504
    %v511 = vpack.c.bf16 %v506, %v506
    %516 = vrot.lane.b32.xlu0 %v508, 64
    %v517 = vpop.permute.xlu0 %516
    %518 = vrot.lane.b32.xlu0 %v509, 64
    %v519 = vpop.permute.xlu0 %518
    %520 = vrot.lane.b32.xlu0 %v510, 64
    %v521 = vpop.permute.xlu0 %520
    %522 = vrot.lane.b32.xlu0 %v511, 64
    %v523 = vpop.permute.xlu0 %522
    %528 = vst.msk [vmem:[#allocation2 + $0x8] sm:$0xf] %vm303, %v517
    %529 = vst.msk [vmem:[#allocation2 + $0x18] sm:$0xf] %vm303, %v519
    %530 = vst.msk [vmem:[#allocation2 + $0x28] sm:$0xf] %vm303, %v521
    %531 = vst.msk [vmem:[#allocation2 + $0x38] sm:$0xf] %vm303, %v523
    %s532 = scalar_lea.vmem [#allocation3], 96
    %v533 = vld [vmem:[%s532] sm:$0xf]
    %v534 = vld [vmem:[%s532 + $0x4] sm:$0xf]
    %v535 = vld [vmem:[%s532 + $0x8] sm:$0xf]
    %v536 = vld [vmem:[%s532 + $0xc] sm:$0xf]
    %v541 = vunpack.c.l.b16 %v533
    %v542 = vunpack.c.l.b16 %v534
    %v543 = vunpack.c.l.b16 %v535
    %v544 = vunpack.c.l.b16 %v536
    %v545 = vpack.c.b16 %v542, %v541
    %v546 = vpack.c.b16 %v544, %v543
    %v548 = vsel %vm208, %v545, 0
    %v551 = vsel %vm208, %v546, 0
    %553 = vmatpush.bf16.msra.mxu0 0
    %554 = vmatpush.bf16.msra.mxu0 0
    %555 = vmatpush.bf16.msra.mxu0 0
    %556 = vmatpush.bf16.msra.mxu0 0
    %557 = vmatpush.bf16.msra.mxu0 0
    %558 = vmatpush.bf16.msra.mxu0 0
    %559 = vmatpush.bf16.msra.mxu0 %v193
    %560 = vmatpush.bf16.msra.mxu0 %v192
    %561 = vmatmul.bf16.gmra.mxu0 %v548
    %v562 = vpop.f32.mrf.mxu0
    %v563 = vadd.f32 0.0, %v562
    %v564 = vpop.f32.mrf.mxu0
    %v565 = vadd.f32 0.0, %v564
    %566 = vmatmul.bf16.gmra.mxu0 %v551
    %v567 = vpop.f32.mrf.mxu0
    %v568 = vadd.f32 0.0, %v567
    %v569 = vpop.f32.mrf.mxu0
    %v570 = vadd.f32 0.0, %v569
    %571 = vdwg.mxu0
    %v572 = vpack.c.bf16 %v563, %v563
    %v573 = vpack.c.bf16 %v565, %v565
    %v574 = vpack.c.bf16 %v568, %v568
    %v575 = vpack.c.bf16 %v570, %v570
    %576 = vst.msk [vmem:[#allocation2 + $0xc] sm:$0xf] %vm238, %v572
    %577 = vst.msk [vmem:[#allocation2 + $0x1c] sm:$0xf] %vm238, %v573
    %578 = vst.msk [vmem:[#allocation2 + $0x2c] sm:$0xf] %vm238, %v574
    %579 = vst.msk [vmem:[#allocation2 + $0x3c] sm:$0xf] %vm238, %v575
    %v580 = vld [vmem:[#allocation2] sm:$0xff]
    %v581 = vld [vmem:[#allocation2 + $0x8] sm:$0xff]
    %v582 = vld [vmem:[#allocation2 + $0x10] sm:$0xff]
    %v583 = vld [vmem:[#allocation2 + $0x18] sm:$0xff]
    %v584 = vld [vmem:[#allocation2 + $0x20] sm:$0xff]
    %v585 = vld [vmem:[#allocation2 + $0x28] sm:$0xff]
    %v586 = vld [vmem:[#allocation2 + $0x30] sm:$0xff]
    %v587 = vld [vmem:[#allocation2 + $0x38] sm:$0xff]
    %v588 = vld [vmem:[#allocation5] sm:$0xf]
    %v589 = vld [vmem:[#allocation5 + $0x4] sm:$0xf]
    %v590 = vld [vmem:[#allocation5 + $0x8] sm:$0xf]
    %v591 = vld [vmem:[#allocation5 + $0xc] sm:$0xf]
    %v592 = vld [vmem:[#allocation5 + $0x10] sm:$0xf]
    %v593 = vld [vmem:[#allocation5 + $0x14] sm:$0xf]
    %v594 = vld [vmem:[#allocation5 + $0x18] sm:$0xf]
    %v595 = vld [vmem:[#allocation5 + $0x1c] sm:$0xf]
    %v596 = vld [vmem:[#allocation5 + $0x20] sm:$0xf]
    %v597 = vld [vmem:[#allocation5 + $0x24] sm:$0xf]
    %v598 = vld [vmem:[#allocation5 + $0x28] sm:$0xf]
    %v599 = vld [vmem:[#allocation5 + $0x2c] sm:$0xf]
    %v600 = vld [vmem:[#allocation5 + $0x30] sm:$0xf]
    %v601 = vld [vmem:[#allocation5 + $0x34] sm:$0xf]
    %v602 = vld [vmem:[#allocation5 + $0x38] sm:$0xf]
    %v603 = vld [vmem:[#allocation5 + $0x3c] sm:$0xf]
    %v604 = vld [vmem:[#allocation5 + $0x40] sm:$0xf]
    %v605 = vld [vmem:[#allocation5 + $0x44] sm:$0xf]
    %v606 = vld [vmem:[#allocation5 + $0x48] sm:$0xf]
    %v607 = vld [vmem:[#allocation5 + $0x4c] sm:$0xf]
    %v608 = vld [vmem:[#allocation5 + $0x50] sm:$0xf]
    %v609 = vld [vmem:[#allocation5 + $0x54] sm:$0xf]
    %v610 = vld [vmem:[#allocation5 + $0x58] sm:$0xf]
    %v611 = vld [vmem:[#allocation5 + $0x5c] sm:$0xf]
    %v612 = vld [vmem:[#allocation5 + $0x60] sm:$0xf]
    %v613 = vld [vmem:[#allocation5 + $0x64] sm:$0xf]
    %v614 = vld [vmem:[#allocation5 + $0x68] sm:$0xf]
    %v615 = vld [vmem:[#allocation5 + $0x6c] sm:$0xf]
    %v616 = vld [vmem:[#allocation5 + $0x70] sm:$0xf]
    %v617 = vld [vmem:[#allocation5 + $0x74] sm:$0xf]
    %v618 = vld [vmem:[#allocation5 + $0x78] sm:$0xf]
    %v619 = vld [vmem:[#allocation5 + $0x7c] sm:$0xf]
    %v620 = vld [vmem:[#allocation5 + $0x80] sm:$0xf]
    %v621 = vld [vmem:[#allocation5 + $0x84] sm:$0xf]
    %v622 = vld [vmem:[#allocation5 + $0x88] sm:$0xf]
    %v623 = vld [vmem:[#allocation5 + $0x8c] sm:$0xf]
    %v624 = vld [vmem:[#allocation5 + $0x90] sm:$0xf]
    %v625 = vld [vmem:[#allocation5 + $0x94] sm:$0xf]
    %v626 = vld [vmem:[#allocation5 + $0x98] sm:$0xf]
    %v627 = vld [vmem:[#allocation5 + $0x9c] sm:$0xf]
    %v628 = vld [vmem:[#allocation5 + $0xa0] sm:$0xf]
    %v629 = vld [vmem:[#allocation5 + $0xa4] sm:$0xf]
    %v630 = vld [vmem:[#allocation5 + $0xa8] sm:$0xf]
    %v631 = vld [vmem:[#allocation5 + $0xac] sm:$0xf]
    %v632 = vld [vmem:[#allocation5 + $0xb0] sm:$0xf]
    %v633 = vld [vmem:[#allocation5 + $0xb4] sm:$0xf]
    %v634 = vld [vmem:[#allocation5 + $0xb8] sm:$0xf]
    %v635 = vld [vmem:[#allocation5 + $0xbc] sm:$0xf]
    %v636 = vld [vmem:[#allocation5 + $0xc0] sm:$0xf]
    %v637 = vld [vmem:[#allocation5 + $0xc4] sm:$0xf]
    %v638 = vld [vmem:[#allocation5 + $0xc8] sm:$0xf]
    %v639 = vld [vmem:[#allocation5 + $0xcc] sm:$0xf]
    %v640 = vld [vmem:[#allocation5 + $0xd0] sm:$0xf]
    %v641 = vld [vmem:[#allocation5 + $0xd4] sm:$0xf]
    %v642 = vld [vmem:[#allocation5 + $0xd8] sm:$0xf]
    %v643 = vld [vmem:[#allocation5 + $0xdc] sm:$0xf]
    %v644 = vld [vmem:[#allocation7] sm:$0x1]
    %v646 = vperm.slane %v644, 0
    %v656 = vunpack.c.l.b16 %v580
    %v657 = vunpack.c.h.b16 %v580
    %v658 = vunpack.c.l.b16 %v581
    %v659 = vunpack.c.h.b16 %v581
    %v660 = vunpack.c.l.b16 %v582
    %v661 = vunpack.c.h.b16 %v582
    %v662 = vunpack.c.l.b16 %v583
    %v663 = vunpack.c.h.b16 %v583
    %v664 = vunpack.c.l.b16 %v584
    %v665 = vunpack.c.h.b16 %v584
    %v666 = vunpack.c.l.b16 %v585
    %v667 = vunpack.c.h.b16 %v585
    %v668 = vunpack.c.l.b16 %v586
    %v669 = vunpack.c.h.b16 %v586
    %v670 = vunpack.c.l.b16 %v587
    %v671 = vunpack.c.h.b16 %v587
    %v672 = vpack.c.b16 %v660, %v656
    %v673 = vpack.c.b16 %v661, %v657
    %v674 = vpack.c.b16 %v662, %v658
    %v675 = vpack.c.b16 %v663, %v659
    %v676 = vpack.c.b16 %v668, %v664
    %v677 = vpack.c.b16 %v669, %v665
    %v678 = vpack.c.b16 %v670, %v666
    %v679 = vpack.c.b16 %v671, %v667
    %v742 = vunpack.c.l.b16 %v588
    %v743 = vunpack.c.l.b16 %v589
    %v744 = vunpack.c.l.b16 %v590
    %v745 = vunpack.c.l.b16 %v591
    %v746 = vunpack.c.l.b16 %v592
    %v747 = vunpack.c.l.b16 %v593
    %v748 = vunpack.c.l.b16 %v594
    %v749 = vunpack.c.l.b16 %v595
    %v750 = vunpack.c.l.b16 %v596
    %v751 = vunpack.c.l.b16 %v597
    %v752 = vunpack.c.l.b16 %v598
    %v753 = vunpack.c.l.b16 %v599
    %v754 = vunpack.c.l.b16 %v600
    %v755 = vunpack.c.l.b16 %v601
    %v756 = vunpack.c.l.b16 %v602
    %v757 = vunpack.c.l.b16 %v603
    %v758 = vunpack.c.l.b16 %v604
    %v759 = vunpack.c.l.b16 %v605
    %v760 = vunpack.c.l.b16 %v606
    %v761 = vunpack.c.l.b16 %v607
    %v762 = vunpack.c.l.b16 %v608
    %v763 = vunpack.c.l.b16 %v609
    %v764 = vunpack.c.l.b16 %v610
    %v765 = vunpack.c.l.b16 %v611
    %v766 = vunpack.c.l.b16 %v612
    %v767 = vunpack.c.l.b16 %v613
    %v768 = vunpack.c.l.b16 %v614
    %v769 = vunpack.c.l.b16 %v615
    %v770 = vunpack.c.l.b16 %v616
    %v771 = vunpack.c.l.b16 %v617
    %v772 = vunpack.c.l.b16 %v618
    %v773 = vunpack.c.l.b16 %v619
    %v774 = vunpack.c.l.b16 %v620
    %v775 = vunpack.c.l.b16 %v621
    %v776 = vunpack.c.l.b16 %v622
    %v777 = vunpack.c.l.b16 %v623
    %v778 = vunpack.c.l.b16 %v624
    %v779 = vunpack.c.l.b16 %v625
    %v780 = vunpack.c.l.b16 %v626
    %v781 = vunpack.c.l.b16 %v627
    %v782 = vunpack.c.l.b16 %v628
    %v783 = vunpack.c.l.b16 %v629
    %v784 = vunpack.c.l.b16 %v630
    %v785 = vunpack.c.l.b16 %v631
    %v786 = vunpack.c.l.b16 %v632
    %v787 = vunpack.c.l.b16 %v633
    %v788 = vunpack.c.l.b16 %v634
    %v789 = vunpack.c.l.b16 %v635
    %v790 = vunpack.c.l.b16 %v636
    %v791 = vunpack.c.l.b16 %v637
    %v792 = vunpack.c.l.b16 %v638
    %v793 = vunpack.c.l.b16 %v639
    %v794 = vunpack.c.l.b16 %v640
    %v795 = vunpack.c.l.b16 %v641
    %v796 = vunpack.c.l.b16 %v642
    %v797 = vunpack.c.l.b16 %v643
    %v798 = vpack.c.b16 %v743, %v742
    %v799 = vpack.c.b16 %v745, %v744
    %v800 = vpack.c.b16 %v747, %v746
    %v801 = vpack.c.b16 %v749, %v748
    %v802 = vpack.c.b16 %v751, %v750
    %v803 = vpack.c.b16 %v753, %v752
    %v804 = vpack.c.b16 %v755, %v754
    %v805 = vpack.c.b16 %v757, %v756
    %v806 = vpack.c.b16 %v759, %v758
    %v807 = vpack.c.b16 %v761, %v760
    %v808 = vpack.c.b16 %v763, %v762
    %v809 = vpack.c.b16 %v765, %v764
    %v810 = vpack.c.b16 %v767, %v766
    %v811 = vpack.c.b16 %v769, %v768
    %v812 = vpack.c.b16 %v771, %v770
    %v813 = vpack.c.b16 %v773, %v772
    %v814 = vpack.c.b16 %v775, %v774
    %v815 = vpack.c.b16 %v777, %v776
    %v816 = vpack.c.b16 %v779, %v778
    %v817 = vpack.c.b16 %v781, %v780
    %v818 = vpack.c.b16 %v783, %v782
    %v819 = vpack.c.b16 %v785, %v784
    %v820 = vpack.c.b16 %v787, %v786
    %v821 = vpack.c.b16 %v789, %v788
    %v822 = vpack.c.b16 %v791, %v790
    %v823 = vpack.c.b16 %v793, %v792
    %v824 = vpack.c.b16 %v795, %v794
    %v825 = vpack.c.b16 %v797, %v796
    %vm854 = vcmask 523264
    %v856 = vsel %vm854, %v675, 0
    %v859 = vsel %vm854, %v679, 0
    %861 = vmatpush.bf16.msra.mxu0 %v805
    %862 = vmatpush.bf16.msra.mxu0 %v804
    %863 = vmatpush.bf16.msra.mxu0 %v803
    %864 = vmatpush.bf16.msra.mxu0 %v802
    %865 = vmatpush.bf16.msra.mxu0 %v801
    %866 = vmatpush.bf16.msra.mxu0 %v800
    %867 = vmatpush.bf16.msra.mxu0 %v799
    %868 = vmatpush.bf16.msra.mxu0 %v798
    %869 = vmatmul.bf16.gmra.mxu0 %v672
    %v870 = vpop.f32.mrf.mxu0
    %v871 = vadd.f32 %v646, %v870
    %v872 = vpop.f32.mrf.mxu0
    %v873 = vadd.f32 %v646, %v872
    %874 = vmatmul.bf16.gmra.mxu0 %v676
    %v875 = vpop.f32.mrf.mxu0
    %v876 = vadd.f32 %v646, %v875
    %v877 = vpop.f32.mrf.mxu0
    %v878 = vadd.f32 %v646, %v877
    %879 = vdwg.mxu0
    %880 = vmatpush.bf16.msra.mxu0 %v813
    %881 = vmatpush.bf16.msra.mxu0 %v812
    %882 = vmatpush.bf16.msra.mxu0 %v811
    %883 = vmatpush.bf16.msra.mxu0 %v810
    %884 = vmatpush.bf16.msra.mxu0 %v809
    %885 = vmatpush.bf16.msra.mxu0 %v808
    %886 = vmatpush.bf16.msra.mxu0 %v807
    %887 = vmatpush.bf16.msra.mxu0 %v806
    %888 = vmatmul.bf16.gmra.mxu0 %v673
    %v889 = vpop.f32.mrf.mxu0
    %v890 = vadd.f32 %v871, %v889
    %v891 = vpop.f32.mrf.mxu0
    %v892 = vadd.f32 %v873, %v891
    %893 = vmatmul.bf16.gmra.mxu0 %v677
    %v894 = vpop.f32.mrf.mxu0
    %v895 = vadd.f32 %v876, %v894
    %v896 = vpop.f32.mrf.mxu0
    %v897 = vadd.f32 %v878, %v896
    %898 = vdwg.mxu0
    %899 = vmatpush.bf16.msra.mxu0 %v821
    %900 = vmatpush.bf16.msra.mxu0 %v820
    %901 = vmatpush.bf16.msra.mxu0 %v819
    %902 = vmatpush.bf16.msra.mxu0 %v818
    %903 = vmatpush.bf16.msra.mxu0 %v817
    %904 = vmatpush.bf16.msra.mxu0 %v816
    %905 = vmatpush.bf16.msra.mxu0 %v815
    %906 = vmatpush.bf16.msra.mxu0 %v814
    %907 = vmatmul.bf16.gmra.mxu0 %v674
    %v908 = vpop.f32.mrf.mxu0
    %v909 = vadd.f32 %v890, %v908
    %v910 = vpop.f32.mrf.mxu0
    %v911 = vadd.f32 %v892, %v910
    %912 = vmatmul.bf16.gmra.mxu0 %v678
    %v913 = vpop.f32.mrf.mxu0
    %v914 = vadd.f32 %v895, %v913
    %v915 = vpop.f32.mrf.mxu0
    %v916 = vadd.f32 %v897, %v915
    %917 = vdwg.mxu0
    %918 = vmatpush.bf16.msra.mxu0 0
    %919 = vmatpush.bf16.msra.mxu0 0
    %920 = vmatpush.bf16.msra.mxu0 0
    %921 = vmatpush.bf16.msra.mxu0 0
    %922 = vmatpush.bf16.msra.mxu0 %v825
    %923 = vmatpush.bf16.msra.mxu0 %v824
    %924 = vmatpush.bf16.msra.mxu0 %v823
    %925 = vmatpush.bf16.msra.mxu0 %v822
    %926 = vmatmul.bf16.gmra.mxu0 %v856
    %v927 = vpop.f32.mrf.mxu0
    %v928 = vadd.f32 %v909, %v927
    %v929 = vpop.f32.mrf.mxu0
    %v930 = vadd.f32 %v911, %v929
    %931 = vmatmul.bf16.gmra.mxu0 %v859
    %v932 = vpop.f32.mrf.mxu0
    %v933 = vadd.f32 %v914, %v932
    %v934 = vpop.f32.mrf.mxu0
    %v935 = vadd.f32 %v916, %v934
    %936 = vdwg.mxu0
    %v937 = vmax.f32 %v928, 0.0
    %v938 = vmax.f32 %v930, 0.0
    %v939 = vmax.f32 %v933, 0.0
    %v940 = vmax.f32 %v935, 0.0
    %v941 = vpack.c.bf16 %v938, %v937
    %v942 = vpack.c.bf16 %v940, %v939
    %v943 = vld [vmem:[#allocation8] sm:$0xf]
    %v944 = vld [vmem:[#allocation8 + $0x4] sm:$0xf]
    %v947 = vunpack.c.l.b16 %v943
    %v948 = vunpack.c.l.b16 %v944
    %v949 = vpack.c.b16 %v948, %v947
    %v951 = vsel %vm208, %v949, 0
    %953 = vmatpush.bf16.msra.mxu0 0
    %954 = vmatpush.bf16.msra.mxu0 0
    %955 = vmatpush.bf16.msra.mxu0 0
    %956 = vmatpush.bf16.msra.mxu0 0
    %957 = vmatpush.bf16.msra.mxu0 0
    %958 = vmatpush.bf16.msra.mxu0 0
    %959 = vmatpush.bf16.msra.mxu0 %v942
    %960 = vmatpush.bf16.msra.mxu0 %v941
    %961 = vmatmul.bf16.gmra.mxu0 %v951
    %v962 = vpop.f32.mrf.mxu0
    %v963 = vadd.f32 0.0, %v962
    %v964 = vpop.f32.mrf.mxu0
    %v965 = vadd.f32 0.0, %v964
    %966 = vdwg.mxu0
    %v967 = vpack.c.bf16 %v963, %v963
    %v968 = vpack.c.bf16 %v965, %v965
    %969 = vst [vmem:[#allocation2] sm:$0xf] %v967
    %970 = vst [vmem:[#allocation2 + $0x10] sm:$0xf] %v968
    %s971 = scalar_lea.vmem [#allocation8], 8
    %v972 = vld [vmem:[%s971] sm:$0xf]
    %v973 = vld [vmem:[%s971 + $0x4] sm:$0xf]
    %v976 = vunpack.c.l.b16 %v972
    %v977 = vunpack.c.l.b16 %v973
    %v978 = vpack.c.b16 %v977, %v976
    %v980 = vsel %vm208, %v978, 0
    %982 = vmatpush.bf16.msra.mxu0 0
    %983 = vmatpush.bf16.msra.mxu0 0
    %984 = vmatpush.bf16.msra.mxu0 0
    %985 = vmatpush.bf16.msra.mxu0 0
    %986 = vmatpush.bf16.msra.mxu0 0
    %987 = vmatpush.bf16.msra.mxu0 0
    %988 = vmatpush.bf16.msra.mxu0 %v942
    %989 = vmatpush.bf16.msra.mxu0 %v941
    %990 = vmatmul.bf16.gmra.mxu0 %v980
    %v991 = vpop.f32.mrf.mxu0
    %v992 = vadd.f32 0.0, %v991
    %v993 = vpop.f32.mrf.mxu0
    %v994 = vadd.f32 0.0, %v993
    %995 = vdwg.mxu0
    %v996 = vpack.c.bf16 %v992, %v992
    %v997 = vpack.c.bf16 %v994, %v994
    %998 = vst [vmem:[#allocation2 + $0x4] sm:$0xf] %v996
    %999 = vst [vmem:[#allocation2 + $0x14] sm:$0xf] %v997
    %s1000 = scalar_lea.vmem [#allocation8], 16
    %v1001 = vld [vmem:[%s1000] sm:$0xf]
    %v1002 = vld [vmem:[%s1000 + $0x4] sm:$0xf]
    %v1005 = vunpack.c.l.b16 %v1001
    %v1006 = vunpack.c.l.b16 %v1002
    %v1007 = vpack.c.b16 %v1006, %v1005
    %v1009 = vsel %vm208, %v1007, 0
    %1011 = vmatpush.bf16.msra.mxu0 0
    %1012 = vmatpush.bf16.msra.mxu0 0
    %1013 = vmatpush.bf16.msra.mxu0 0
    %1014 = vmatpush.bf16.msra.mxu0 0
    %1015 = vmatpush.bf16.msra.mxu0 0
    %1016 = vmatpush.bf16.msra.mxu0 0
    %1017 = vmatpush.bf16.msra.mxu0 %v942
    %1018 = vmatpush.bf16.msra.mxu0 %v941
    %1019 = vmatmul.bf16.gmra.mxu0 %v1009
    %v1020 = vpop.f32.mrf.mxu0
    %v1021 = vadd.f32 0.0, %v1020
    %v1022 = vpop.f32.mrf.mxu0
    %v1023 = vadd.f32 0.0, %v1022
    %1024 = vdwg.mxu0
    %v1025 = vpack.c.bf16 %v1021, %v1021
    %v1026 = vpack.c.bf16 %v1023, %v1023
    %1027 = vst [vmem:[#allocation2 + $0x8] sm:$0xf] %v1025
    %1028 = vst [vmem:[#allocation2 + $0x18] sm:$0xf] %v1026
    %s1029 = scalar_lea.vmem [#allocation8], 24
    %v1030 = vld [vmem:[%s1029] sm:$0xf]
    %v1031 = vld [vmem:[%s1029 + $0x4] sm:$0xf]
    %v1034 = vunpack.c.l.b16 %v1030
    %v1035 = vunpack.c.l.b16 %v1031
    %v1036 = vpack.c.b16 %v1035, %v1034
    %v1038 = vsel %vm208, %v1036, 0
    %1040 = vmatpush.bf16.msra.mxu0 0
    %1041 = vmatpush.bf16.msra.mxu0 0
    %1042 = vmatpush.bf16.msra.mxu0 0
    %1043 = vmatpush.bf16.msra.mxu0 0
    %1044 = vmatpush.bf16.msra.mxu0 0
    %1045 = vmatpush.bf16.msra.mxu0 0
    %1046 = vmatpush.bf16.msra.mxu0 %v942
    %1047 = vmatpush.bf16.msra.mxu0 %v941
    %1048 = vmatmul.bf16.gmra.mxu0 %v1038
    %v1049 = vpop.f32.mrf.mxu0
    %v1050 = vadd.f32 0.0, %v1049
    %v1051 = vpop.f32.mrf.mxu0
    %v1052 = vadd.f32 0.0, %v1051
    %1053 = vdwg.mxu0
    %v1054 = vpack.c.bf16 %v1050, %v1050
    %v1055 = vpack.c.bf16 %v1052, %v1052
    %1056 = vst [vmem:[#allocation2 + $0xc] sm:$0xf] %v1054
    %1057 = vst [vmem:[#allocation2 + $0x1c] sm:$0xf] %v1055
    %v1058 = vld [vmem:[#allocation2] sm:$0xff]
    %v1059 = vld [vmem:[#allocation2 + $0x8] sm:$0xff]
    %v1060 = vld [vmem:[#allocation2 + $0x10] sm:$0xff]
    %v1061 = vld [vmem:[#allocation2 + $0x18] sm:$0xff]
    %v1062 = vld [vmem:[#allocation10] sm:$0xf]
    %v1063 = vld [vmem:[#allocation10 + $0x4] sm:$0xf]
    %v1064 = vld [vmem:[#allocation10 + $0x8] sm:$0xf]
    %v1065 = vld [vmem:[#allocation10 + $0xc] sm:$0xf]
    %v1066 = vld [vmem:[#allocation10 + $0x10] sm:$0xf]
    %v1067 = vld [vmem:[#allocation10 + $0x14] sm:$0xf]
    %v1068 = vld [vmem:[#allocation10 + $0x18] sm:$0xf]
    %v1069 = vld [vmem:[#allocation10 + $0x1c] sm:$0xf]
    %v1070 = vld [vmem:[#allocation10 + $0x20] sm:$0xf]
    %v1071 = vld [vmem:[#allocation10 + $0x24] sm:$0xf]
    %v1072 = vld [vmem:[#allocation10 + $0x28] sm:$0xf]
    %v1073 = vld [vmem:[#allocation10 + $0x2c] sm:$0xf]
    %v1074 = vld [vmem:[#allocation10 + $0x30] sm:$0xf]
    %v1075 = vld [vmem:[#allocation10 + $0x34] sm:$0xf]
    %v1076 = vld [vmem:[#allocation10 + $0x38] sm:$0xf]
    %v1077 = vld [vmem:[#allocation10 + $0x3c] sm:$0xf]
    %v1078 = vld [vmem:[#allocation10 + $0x40] sm:$0xf]
    %v1079 = vld [vmem:[#allocation10 + $0x44] sm:$0xf]
    %v1080 = vld [vmem:[#allocation10 + $0x48] sm:$0xf]
    %v1081 = vld [vmem:[#allocation10 + $0x4c] sm:$0xf]
    %v1082 = vld [vmem:[#allocation10 + $0x50] sm:$0xf]
    %v1083 = vld [vmem:[#allocation10 + $0x54] sm:$0xf]
    %v1084 = vld [vmem:[#allocation10 + $0x58] sm:$0xf]
    %v1085 = vld [vmem:[#allocation10 + $0x5c] sm:$0xf]
    %v1086 = vld [vmem:[#allocation10 + $0x60] sm:$0xf]
    %v1087 = vld [vmem:[#allocation10 + $0x64] sm:$0xf]
    %v1088 = vld [vmem:[#allocation10 + $0x68] sm:$0xf]
    %v1089 = vld [vmem:[#allocation10 + $0x6c] sm:$0xf]
    %v1090 = vld [vmem:[#allocation10 + $0x70] sm:$0xf]
    %v1091 = vld [vmem:[#allocation10 + $0x74] sm:$0xf]
    %v1092 = vld [vmem:[#allocation10 + $0x78] sm:$0xf]
    %v1093 = vld [vmem:[#allocation10 + $0x7c] sm:$0xf]
    %v1094 = vld [vmem:[#allocation10 + $0x80] sm:$0xf]
    %v1095 = vld [vmem:[#allocation10 + $0x84] sm:$0xf]
    %v1096 = vld [vmem:[#allocation10 + $0x88] sm:$0xf]
    %v1097 = vld [vmem:[#allocation10 + $0x8c] sm:$0xf]
    %v1098 = vld [vmem:[#allocation10 + $0x90] sm:$0xf]
    %v1099 = vld [vmem:[#allocation10 + $0x94] sm:$0xf]
    %v1100 = vld [vmem:[#allocation10 + $0x98] sm:$0xf]
    %v1101 = vld [vmem:[#allocation10 + $0x9c] sm:$0xf]
    %v1102 = vld [vmem:[#allocation10 + $0xa0] sm:$0xf]
    %v1103 = vld [vmem:[#allocation10 + $0xa4] sm:$0xf]
    %v1104 = vld [vmem:[#allocation10 + $0xa8] sm:$0xf]
    %v1105 = vld [vmem:[#allocation10 + $0xac] sm:$0xf]
    %v1106 = vld [vmem:[#allocation10 + $0xb0] sm:$0xf]
    %v1107 = vld [vmem:[#allocation10 + $0xb4] sm:$0xf]
    %v1108 = vld [vmem:[#allocation10 + $0xb8] sm:$0xf]
    %v1109 = vld [vmem:[#allocation10 + $0xbc] sm:$0xf]
    %v1110 = vld [vmem:[#allocation10 + $0xc0] sm:$0xf]
    %v1111 = vld [vmem:[#allocation10 + $0xc4] sm:$0xf]
    %v1112 = vld [vmem:[#allocation10 + $0xc8] sm:$0xf]
    %v1113 = vld [vmem:[#allocation10 + $0xcc] sm:$0xf]
    %v1114 = vld [vmem:[#allocation10 + $0xd0] sm:$0xf]
    %v1115 = vld [vmem:[#allocation10 + $0xd4] sm:$0xf]
    %v1116 = vld [vmem:[#allocation10 + $0xd8] sm:$0xf]
    %v1117 = vld [vmem:[#allocation10 + $0xdc] sm:$0xf]
    %v1118 = vld [vmem:[#allocation10 + $0xe0] sm:$0xf]
    %v1119 = vld [vmem:[#allocation10 + $0xe4] sm:$0xf]
    %v1120 = vld [vmem:[#allocation10 + $0xe8] sm:$0xf]
    %v1121 = vld [vmem:[#allocation10 + $0xec] sm:$0xf]
    %v1122 = vld [vmem:[#allocation10 + $0xf0] sm:$0xf]
    %v1123 = vld [vmem:[#allocation10 + $0xf4] sm:$0xf]
    %v1124 = vld [vmem:[#allocation10 + $0xf8] sm:$0xf]
    %v1125 = vld [vmem:[#allocation10 + $0xfc] sm:$0xf]
    %v1126 = vld [vmem:[#allocation11] sm:$0x1]
    %v1128 = vperm.slane %v1126, 0
    %v1134 = vunpack.c.l.b16 %v1058
    %v1135 = vunpack.c.h.b16 %v1058
    %v1136 = vunpack.c.l.b16 %v1059
    %v1137 = vunpack.c.h.b16 %v1059
    %v1138 = vunpack.c.l.b16 %v1060
    %v1139 = vunpack.c.h.b16 %v1060
    %v1140 = vunpack.c.l.b16 %v1061
    %v1141 = vunpack.c.h.b16 %v1061
    %v1142 = vpack.c.b16 %v1138, %v1134
    %v1143 = vpack.c.b16 %v1139, %v1135
    %v1144 = vpack.c.b16 %v1140, %v1136
    %v1145 = vpack.c.b16 %v1141, %v1137
    %v1214 = vunpack.c.l.b16 %v1062
    %v1215 = vunpack.c.l.b16 %v1063
    %v1216 = vunpack.c.l.b16 %v1064
    %v1217 = vunpack.c.l.b16 %v1065
    %v1218 = vunpack.c.l.b16 %v1066
    %v1219 = vunpack.c.l.b16 %v1067
    %v1220 = vunpack.c.l.b16 %v1068
    %v1221 = vunpack.c.l.b16 %v1069
    %v1222 = vunpack.c.l.b16 %v1070
    %v1223 = vunpack.c.l.b16 %v1071
    %v1224 = vunpack.c.l.b16 %v1072
    %v1225 = vunpack.c.l.b16 %v1073
    %v1226 = vunpack.c.l.b16 %v1074
    %v1227 = vunpack.c.l.b16 %v1075
    %v1228 = vunpack.c.l.b16 %v1076
    %v1229 = vunpack.c.l.b16 %v1077
    %v1230 = vunpack.c.l.b16 %v1078
    %v1231 = vunpack.c.l.b16 %v1079
    %v1232 = vunpack.c.l.b16 %v1080
    %v1233 = vunpack.c.l.b16 %v1081
    %v1234 = vunpack.c.l.b16 %v1082
    %v1235 = vunpack.c.l.b16 %v1083
    %v1236 = vunpack.c.l.b16 %v1084
    %v1237 = vunpack.c.l.b16 %v1085
    %v1238 = vunpack.c.l.b16 %v1086
    %v1239 = vunpack.c.l.b16 %v1087
    %v1240 = vunpack.c.l.b16 %v1088
    %v1241 = vunpack.c.l.b16 %v1089
    %v1242 = vunpack.c.l.b16 %v1090
    %v1243 = vunpack.c.l.b16 %v1091
    %v1244 = vunpack.c.l.b16 %v1092
    %v1245 = vunpack.c.l.b16 %v1093
    %v1246 = vunpack.c.l.b16 %v1094
    %v1247 = vunpack.c.l.b16 %v1095
    %v1248 = vunpack.c.l.b16 %v1096
    %v1249 = vunpack.c.l.b16 %v1097
    %v1250 = vunpack.c.l.b16 %v1098
    %v1251 = vunpack.c.l.b16 %v1099
    %v1252 = vunpack.c.l.b16 %v1100
    %v1253 = vunpack.c.l.b16 %v1101
    %v1254 = vunpack.c.l.b16 %v1102
    %v1255 = vunpack.c.l.b16 %v1103
    %v1256 = vunpack.c.l.b16 %v1104
    %v1257 = vunpack.c.l.b16 %v1105
    %v1258 = vunpack.c.l.b16 %v1106
    %v1259 = vunpack.c.l.b16 %v1107
    %v1260 = vunpack.c.l.b16 %v1108
    %v1261 = vunpack.c.l.b16 %v1109
    %v1262 = vunpack.c.l.b16 %v1110
    %v1263 = vunpack.c.l.b16 %v1111
    %v1264 = vunpack.c.l.b16 %v1112
    %v1265 = vunpack.c.l.b16 %v1113
    %v1266 = vunpack.c.l.b16 %v1114
    %v1267 = vunpack.c.l.b16 %v1115
    %v1268 = vunpack.c.l.b16 %v1116
    %v1269 = vunpack.c.l.b16 %v1117
    %v1270 = vunpack.c.l.b16 %v1118
    %v1271 = vunpack.c.l.b16 %v1119
    %v1272 = vunpack.c.l.b16 %v1120
    %v1273 = vunpack.c.l.b16 %v1121
    %v1274 = vunpack.c.l.b16 %v1122
    %v1275 = vunpack.c.l.b16 %v1123
    %v1276 = vunpack.c.l.b16 %v1124
    %v1277 = vunpack.c.l.b16 %v1125
    %v1278 = vpack.c.b16 %v1215, %v1214
    %v1279 = vpack.c.b16 %v1217, %v1216
    %v1280 = vpack.c.b16 %v1219, %v1218
    %v1281 = vpack.c.b16 %v1221, %v1220
    %v1282 = vpack.c.b16 %v1223, %v1222
    %v1283 = vpack.c.b16 %v1225, %v1224
    %v1284 = vpack.c.b16 %v1227, %v1226
    %v1285 = vpack.c.b16 %v1229, %v1228
    %v1286 = vpack.c.b16 %v1231, %v1230
    %v1287 = vpack.c.b16 %v1233, %v1232
    %v1288 = vpack.c.b16 %v1235, %v1234
    %v1289 = vpack.c.b16 %v1237, %v1236
    %v1290 = vpack.c.b16 %v1239, %v1238
    %v1291 = vpack.c.b16 %v1241, %v1240
    %v1292 = vpack.c.b16 %v1243, %v1242
    %v1293 = vpack.c.b16 %v1245, %v1244
    %v1294 = vpack.c.b16 %v1247, %v1246
    %v1295 = vpack.c.b16 %v1249, %v1248
    %v1296 = vpack.c.b16 %v1251, %v1250
    %v1297 = vpack.c.b16 %v1253, %v1252
    %v1298 = vpack.c.b16 %v1255, %v1254
    %v1299 = vpack.c.b16 %v1257, %v1256
    %v1300 = vpack.c.b16 %v1259, %v1258
    %v1301 = vpack.c.b16 %v1261, %v1260
    %v1302 = vpack.c.b16 %v1263, %v1262
    %v1303 = vpack.c.b16 %v1265, %v1264
    %v1304 = vpack.c.b16 %v1267, %v1266
    %v1305 = vpack.c.b16 %v1269, %v1268
    %v1306 = vpack.c.b16 %v1271, %v1270
    %v1307 = vpack.c.b16 %v1273, %v1272
    %v1308 = vpack.c.b16 %v1275, %v1274
    %v1309 = vpack.c.b16 %v1277, %v1276
    %1342 = vmatpush.bf16.msra.mxu0 %v1285
    %1343 = vmatpush.bf16.msra.mxu0 %v1284
    %1344 = vmatpush.bf16.msra.mxu0 %v1283
    %1345 = vmatpush.bf16.msra.mxu0 %v1282
    %1346 = vmatpush.bf16.msra.mxu0 %v1281
    %1347 = vmatpush.bf16.msra.mxu0 %v1280
    %1348 = vmatpush.bf16.msra.mxu0 %v1279
    %1349 = vmatpush.bf16.msra.mxu0 %v1278
    %1350 = vmatmul.bf16.gmra.mxu0 %v1142
    %v1351 = vpop.f32.mrf.mxu0
    %v1352 = vadd.f32 %v1128, %v1351
    %v1353 = vpop.f32.mrf.mxu0
    %v1354 = vadd.f32 %v1128, %v1353
    %1355 = vdwg.mxu0
    %1356 = vmatpush.bf16.msra.mxu0 %v1293
    %1357 = vmatpush.bf16.msra.mxu0 %v1292
    %1358 = vmatpush.bf16.msra.mxu0 %v1291
    %1359 = vmatpush.bf16.msra.mxu0 %v1290
    %1360 = vmatpush.bf16.msra.mxu0 %v1289
    %1361 = vmatpush.bf16.msra.mxu0 %v1288
    %1362 = vmatpush.bf16.msra.mxu0 %v1287
    %1363 = vmatpush.bf16.msra.mxu0 %v1286
    %1364 = vmatmul.bf16.gmra.mxu0 %v1143
    %v1365 = vpop.f32.mrf.mxu0
    %v1366 = vadd.f32 %v1352, %v1365
    %v1367 = vpop.f32.mrf.mxu0
    %v1368 = vadd.f32 %v1354, %v1367
    %1369 = vdwg.mxu0
    %1370 = vmatpush.bf16.msra.mxu0 %v1301
    %1371 = vmatpush.bf16.msra.mxu0 %v1300
    %1372 = vmatpush.bf16.msra.mxu0 %v1299
    %1373 = vmatpush.bf16.msra.mxu0 %v1298
    %1374 = vmatpush.bf16.msra.mxu0 %v1297
    %1375 = vmatpush.bf16.msra.mxu0 %v1296
    %1376 = vmatpush.bf16.msra.mxu0 %v1295
    %1377 = vmatpush.bf16.msra.mxu0 %v1294
    %1378 = vmatmul.bf16.gmra.mxu0 %v1144
    %v1379 = vpop.f32.mrf.mxu0
    %v1380 = vadd.f32 %v1366, %v1379
    %v1381 = vpop.f32.mrf.mxu0
    %v1382 = vadd.f32 %v1368, %v1381
    %1383 = vdwg.mxu0
    %1384 = vmatpush.bf16.msra.mxu0 %v1309
    %1385 = vmatpush.bf16.msra.mxu0 %v1308
    %1386 = vmatpush.bf16.msra.mxu0 %v1307
    %1387 = vmatpush.bf16.msra.mxu0 %v1306
    %1388 = vmatpush.bf16.msra.mxu0 %v1305
    %1389 = vmatpush.bf16.msra.mxu0 %v1304
    %1390 = vmatpush.bf16.msra.mxu0 %v1303
    %1391 = vmatpush.bf16.msra.mxu0 %v1302
    %1392 = vmatmul.bf16.gmra.mxu0 %v1145
    %v1393 = vpop.f32.mrf.mxu0
    %v1394 = vadd.f32 %v1380, %v1393
    %v1395 = vpop.f32.mrf.mxu0
    %v1396 = vadd.f32 %v1382, %v1395
    %1397 = vdwg.mxu0
    %v1398 = vmax.f32 %v1394, 0.0
    %v1399 = vmax.f32 %v1396, 0.0
    %v1400 = vpack.c.bf16 %v1399, %v1398
    %v1401 = vld [vmem:[#allocation13] sm:$0xf]
    %vm1402 = vcmask 130048
    %v1404 = vsel %vm1402, %v1401, 0
    %1406 = vmatpush.bf16.msra.mxu0 0
    %1407 = vmatpush.bf16.msra.mxu0 0
    %1408 = vmatpush.bf16.msra.mxu0 0
    %1409 = vmatpush.bf16.msra.mxu0 0
    %1410 = vmatpush.bf16.msra.mxu0 0
    %1411 = vmatpush.bf16.msra.mxu0 0
    %1412 = vmatpush.bf16.msra.mxu0 0
    %1413 = vmatpush.bf16.msra.mxu0 %v1400
    %1414 = vmatmul.bf16.gmra.mxu0 %v1404
    %v1415 = vpop.f32.mrf.mxu0
    %v1416 = vadd.f32 0.0, %v1415
    %v1417 = vpop.f32.mrf.mxu0
    %1418 = vdwg.mxu0
    %v1419 = vpack.c.bf16 %v1416, %v1416
    %1420 = vst [vmem:[#allocation2] sm:$0xf] %v1419
    %s1421 = scalar_lea.vmem [#allocation13], 4
    %v1422 = vld [vmem:[%s1421] sm:$0xf]
    %v1424 = vsel %vm1402, %v1422, 0
    %1426 = vmatpush.bf16.msra.mxu0 0
    %1427 = vmatpush.bf16.msra.mxu0 0
    %1428 = vmatpush.bf16.msra.mxu0 0
    %1429 = vmatpush.bf16.msra.mxu0 0
    %1430 = vmatpush.bf16.msra.mxu0 0
    %1431 = vmatpush.bf16.msra.mxu0 0
    %1432 = vmatpush.bf16.msra.mxu0 0
    %1433 = vmatpush.bf16.msra.mxu0 %v1400
    %1434 = vmatmul.bf16.gmra.mxu0 %v1424
    %v1435 = vpop.f32.mrf.mxu0
    %v1436 = vadd.f32 0.0, %v1435
    %v1437 = vpop.f32.mrf.mxu0
    %1438 = vdwg.mxu0
    %v1439 = vpack.c.bf16 %v1436, %v1436
    %1440 = vst [vmem:[#allocation2 + $0x4] sm:$0xf] %v1439
    %s1441 = scalar_lea.vmem [#allocation13], 8
    %v1442 = vld [vmem:[%s1441] sm:$0xf]
    %v1444 = vsel %vm1402, %v1442, 0
    %1446 = vmatpush.bf16.msra.mxu0 0
    %1447 = vmatpush.bf16.msra.mxu0 0
    %1448 = vmatpush.bf16.msra.mxu0 0
    %1449 = vmatpush.bf16.msra.mxu0 0
    %1450 = vmatpush.bf16.msra.mxu0 0
    %1451 = vmatpush.bf16.msra.mxu0 0
    %1452 = vmatpush.bf16.msra.mxu0 0
    %1453 = vmatpush.bf16.msra.mxu0 %v1400
    %1454 = vmatmul.bf16.gmra.mxu0 %v1444
    %v1455 = vpop.f32.mrf.mxu0
    %v1456 = vadd.f32 0.0, %v1455
    %v1457 = vpop.f32.mrf.mxu0
    %1458 = vdwg.mxu0
    %v1459 = vpack.c.bf16 %v1456, %v1456
    %1460 = vst [vmem:[#allocation2 + $0x8] sm:$0xf] %v1459
    %s1461 = scalar_lea.vmem [#allocation13], 12
    %v1462 = vld [vmem:[%s1461] sm:$0xf]
    %v1464 = vsel %vm1402, %v1462, 0
    %1466 = vmatpush.bf16.msra.mxu0 0
    %1467 = vmatpush.bf16.msra.mxu0 0
    %1468 = vmatpush.bf16.msra.mxu0 0
    %1469 = vmatpush.bf16.msra.mxu0 0
    %1470 = vmatpush.bf16.msra.mxu0 0
    %1471 = vmatpush.bf16.msra.mxu0 0
    %1472 = vmatpush.bf16.msra.mxu0 0
    %1473 = vmatpush.bf16.msra.mxu0 %v1400
    %1474 = vmatmul.bf16.gmra.mxu0 %v1464
    %v1475 = vpop.f32.mrf.mxu0
    %v1476 = vadd.f32 0.0, %v1475
    %v1477 = vpop.f32.mrf.mxu0
    %1478 = vdwg.mxu0
    %v1479 = vpack.c.bf16 %v1476, %v1476
    %1480 = vst [vmem:[#allocation2 + $0xc] sm:$0xf] %v1479
    %v1481 = vld [vmem:[#allocation2] sm:$0xff]
    %v1482 = vld [vmem:[#allocation2 + $0x8] sm:$0xff]
    %v1483 = vld [vmem:[%s8] sm:$0xf]
    %v1484 = vld [vmem:[%s8 + $0x4] sm:$0xf]
    %v1485 = vld [vmem:[%s8 + $0x8] sm:$0xf]
    %v1486 = vld [vmem:[%s8 + $0xc] sm:$0xf]
    %v1487 = vld [vmem:[%s8 + $0x10] sm:$0xf]
    %v1488 = vld [vmem:[%s8 + $0x14] sm:$0xf]
    %v1489 = vld [vmem:[%s8 + $0x18] sm:$0xf]
    %v1490 = vld [vmem:[%s8 + $0x1c] sm:$0xf]
    %v1491 = vld [vmem:[%s8 + $0x20] sm:$0xf]
    %v1492 = vld [vmem:[%s8 + $0x24] sm:$0xf]
    %v1493 = vld [vmem:[%s8 + $0x28] sm:$0xf]
    %v1494 = vld [vmem:[%s8 + $0x2c] sm:$0xf]
    %v1495 = vld [vmem:[%s8 + $0x30] sm:$0xf]
    %v1496 = vld [vmem:[%s8 + $0x34] sm:$0xf]
    %v1497 = vld [vmem:[%s8 + $0x38] sm:$0xf]
    %v1498 = vld [vmem:[%s8 + $0x3c] sm:$0xf]
    %v1499 = vld [vmem:[%s8 + $0x40] sm:$0xf]
    %v1500 = vld [vmem:[%s8 + $0x44] sm:$0xf]
    %v1501 = vld [vmem:[%s8 + $0x48] sm:$0xf]
    %v1502 = vld [vmem:[%s8 + $0x4c] sm:$0xf]
    %v1503 = vld [vmem:[%s8 + $0x50] sm:$0xf]
    %v1504 = vld [vmem:[%s8 + $0x54] sm:$0xf]
    %v1505 = vld [vmem:[%s8 + $0x58] sm:$0xf]
    %v1506 = vld [vmem:[%s8 + $0x5c] sm:$0xf]
    %v1507 = vld [vmem:[%s8 + $0x60] sm:$0xf]
    %v1508 = vld [vmem:[%s8 + $0x64] sm:$0xf]
    %v1509 = vld [vmem:[%s8 + $0x68] sm:$0xf]
    %v1510 = vld [vmem:[%s8 + $0x6c] sm:$0xf]
    %v1511 = vld [vmem:[%s8 + $0x70] sm:$0xf]
    %v1512 = vld [vmem:[%s8 + $0x74] sm:$0xf]
    %v1513 = vld [vmem:[%s8 + $0x78] sm:$0xf]
    %v1514 = vld [vmem:[%s8 + $0x7c] sm:$0xf]
    %v1515 = vld [vmem:[%s8 + $0x80] sm:$0xf]
    %v1516 = vld [vmem:[%s8 + $0x84] sm:$0xf]
    %v1517 = vld [vmem:[%s8 + $0x88] sm:$0xf]
    %v1518 = vld [vmem:[%s8 + $0x8c] sm:$0xf]
    %v1519 = vld [vmem:[%s8 + $0x90] sm:$0xf]
    %v1520 = vld [vmem:[%s8 + $0x94] sm:$0xf]
    %v1521 = vld [vmem:[%s8 + $0x98] sm:$0xf]
    %v1522 = vld [vmem:[%s8 + $0x9c] sm:$0xf]
    %v1523 = vld [vmem:[%s8 + $0xa0] sm:$0xf]
    %v1524 = vld [vmem:[%s8 + $0xa4] sm:$0xf]
    %v1525 = vld [vmem:[%s8 + $0xa8] sm:$0xf]
    %v1526 = vld [vmem:[%s8 + $0xac] sm:$0xf]
    %v1527 = vld [vmem:[%s8 + $0xb0] sm:$0xf]
    %v1528 = vld [vmem:[%s8 + $0xb4] sm:$0xf]
    %v1529 = vld [vmem:[%s8 + $0xb8] sm:$0xf]
    %v1530 = vld [vmem:[%s8 + $0xbc] sm:$0xf]
    %v1531 = vld [vmem:[%s8 + $0xc0] sm:$0xf]
    %v1532 = vld [vmem:[%s8 + $0xc4] sm:$0xf]
    %v1533 = vld [vmem:[%s8 + $0xc8] sm:$0xf]
    %v1534 = vld [vmem:[%s8 + $0xcc] sm:$0xf]
    %v1535 = vld [vmem:[%s8 + $0xd0] sm:$0xf]
    %v1536 = vld [vmem:[%s8 + $0xd4] sm:$0xf]
    %v1537 = vld [vmem:[%s8 + $0xd8] sm:$0xf]
    %v1538 = vld [vmem:[%s8 + $0xdc] sm:$0xf]
    %v1539 = vld [vmem:[%s8 + $0xe0] sm:$0xf]
    %v1540 = vld [vmem:[%s8 + $0xe4] sm:$0xf]
    %v1541 = vld [vmem:[%s8 + $0xe8] sm:$0xf]
    %v1542 = vld [vmem:[%s8 + $0xec] sm:$0xf]
    %v1543 = vld [vmem:[%s8 + $0xf0] sm:$0xf]
    %v1544 = vld [vmem:[%s8 + $0xf4] sm:$0xf]
    %v1545 = vld [vmem:[%s8 + $0xf8] sm:$0xf]
    %v1546 = vld [vmem:[%s8 + $0xfc] sm:$0xf]
    %v1547 = vld [vmem:[#allocation14] sm:$0x1]
    %v1549 = vperm.slane %v1547, 0
    %v1553 = vunpack.c.l.b16 %v1481
    %v1554 = vunpack.c.h.b16 %v1481
    %v1555 = vunpack.c.l.b16 %v1482
    %v1556 = vunpack.c.h.b16 %v1482
    %v1557 = vpack.c.b16 %v1553, %v1553
    %v1558 = vpack.c.b16 %v1554, %v1554
    %v1559 = vpack.c.b16 %v1555, %v1555
    %v1560 = vpack.c.b16 %v1556, %v1556
    %v1629 = vunpack.c.l.b16 %v1483
    %v1630 = vunpack.c.l.b16 %v1484
    %v1631 = vunpack.c.l.b16 %v1485
    %v1632 = vunpack.c.l.b16 %v1486
    %v1633 = vunpack.c.l.b16 %v1487
    %v1634 = vunpack.c.l.b16 %v1488
    %v1635 = vunpack.c.l.b16 %v1489
    %v1636 = vunpack.c.l.b16 %v1490
    %v1637 = vunpack.c.l.b16 %v1491
    %v1638 = vunpack.c.l.b16 %v1492
    %v1639 = vunpack.c.l.b16 %v1493
    %v1640 = vunpack.c.l.b16 %v1494
    %v1641 = vunpack.c.l.b16 %v1495
    %v1642 = vunpack.c.l.b16 %v1496
    %v1643 = vunpack.c.l.b16 %v1497
    %v1644 = vunpack.c.l.b16 %v1498
    %v1645 = vunpack.c.l.b16 %v1499
    %v1646 = vunpack.c.l.b16 %v1500
    %v1647 = vunpack.c.l.b16 %v1501
    %v1648 = vunpack.c.l.b16 %v1502
    %v1649 = vunpack.c.l.b16 %v1503
    %v1650 = vunpack.c.l.b16 %v1504
    %v1651 = vunpack.c.l.b16 %v1505
    %v1652 = vunpack.c.l.b16 %v1506
    %v1653 = vunpack.c.l.b16 %v1507
    %v1654 = vunpack.c.l.b16 %v1508
    %v1655 = vunpack.c.l.b16 %v1509
    %v1656 = vunpack.c.l.b16 %v1510
    %v1657 = vunpack.c.l.b16 %v1511
    %v1658 = vunpack.c.l.b16 %v1512
    %v1659 = vunpack.c.l.b16 %v1513
    %v1660 = vunpack.c.l.b16 %v1514
    %v1661 = vunpack.c.l.b16 %v1515
    %v1662 = vunpack.c.l.b16 %v1516
    %v1663 = vunpack.c.l.b16 %v1517
    %v1664 = vunpack.c.l.b16 %v1518
    %v1665 = vunpack.c.l.b16 %v1519
    %v1666 = vunpack.c.l.b16 %v1520
    %v1667 = vunpack.c.l.b16 %v1521
    %v1668 = vunpack.c.l.b16 %v1522
    %v1669 = vunpack.c.l.b16 %v1523
    %v1670 = vunpack.c.l.b16 %v1524
    %v1671 = vunpack.c.l.b16 %v1525
    %v1672 = vunpack.c.l.b16 %v1526
    %v1673 = vunpack.c.l.b16 %v1527
    %v1674 = vunpack.c.l.b16 %v1528
    %v1675 = vunpack.c.l.b16 %v1529
    %v1676 = vunpack.c.l.b16 %v1530
    %v1677 = vunpack.c.l.b16 %v1531
    %v1678 = vunpack.c.l.b16 %v1532
    %v1679 = vunpack.c.l.b16 %v1533
    %v1680 = vunpack.c.l.b16 %v1534
    %v1681 = vunpack.c.l.b16 %v1535
    %v1682 = vunpack.c.l.b16 %v1536
    %v1683 = vunpack.c.l.b16 %v1537
    %v1684 = vunpack.c.l.b16 %v1538
    %v1685 = vunpack.c.l.b16 %v1539
    %v1686 = vunpack.c.l.b16 %v1540
    %v1687 = vunpack.c.l.b16 %v1541
    %v1688 = vunpack.c.l.b16 %v1542
    %v1689 = vunpack.c.l.b16 %v1543
    %v1690 = vunpack.c.l.b16 %v1544
    %v1691 = vunpack.c.l.b16 %v1545
    %v1692 = vunpack.c.l.b16 %v1546
    %v1693 = vpack.c.b16 %v1630, %v1629
    %v1694 = vpack.c.b16 %v1632, %v1631
    %v1695 = vpack.c.b16 %v1634, %v1633
    %v1696 = vpack.c.b16 %v1636, %v1635
    %v1697 = vpack.c.b16 %v1638, %v1637
    %v1698 = vpack.c.b16 %v1640, %v1639
    %v1699 = vpack.c.b16 %v1642, %v1641
    %v1700 = vpack.c.b16 %v1644, %v1643
    %v1701 = vpack.c.b16 %v1646, %v1645
    %v1702 = vpack.c.b16 %v1648, %v1647
    %v1703 = vpack.c.b16 %v1650, %v1649
    %v1704 = vpack.c.b16 %v1652, %v1651
    %v1705 = vpack.c.b16 %v1654, %v1653
    %v1706 = vpack.c.b16 %v1656, %v1655
    %v1707 = vpack.c.b16 %v1658, %v1657
    %v1708 = vpack.c.b16 %v1660, %v1659
    %v1709 = vpack.c.b16 %v1662, %v1661
    %v1710 = vpack.c.b16 %v1664, %v1663
    %v1711 = vpack.c.b16 %v1666, %v1665
    %v1712 = vpack.c.b16 %v1668, %v1667
    %v1713 = vpack.c.b16 %v1670, %v1669
    %v1714 = vpack.c.b16 %v1672, %v1671
    %v1715 = vpack.c.b16 %v1674, %v1673
    %v1716 = vpack.c.b16 %v1676, %v1675
    %v1717 = vpack.c.b16 %v1678, %v1677
    %v1718 = vpack.c.b16 %v1680, %v1679
    %v1719 = vpack.c.b16 %v1682, %v1681
    %v1720 = vpack.c.b16 %v1684, %v1683
    %v1721 = vpack.c.b16 %v1686, %v1685
    %v1722 = vpack.c.b16 %v1688, %v1687
    %v1723 = vpack.c.b16 %v1690, %v1689
    %v1724 = vpack.c.b16 %v1692, %v1691
    %1757 = vmatpush.bf16.msra.mxu0 %v1700
    %1758 = vmatpush.bf16.msra.mxu0 %v1699
    %1759 = vmatpush.bf16.msra.mxu0 %v1698
    %1760 = vmatpush.bf16.msra.mxu0 %v1697
    %1761 = vmatpush.bf16.msra.mxu0 %v1696
    %1762 = vmatpush.bf16.msra.mxu0 %v1695
    %1763 = vmatpush.bf16.msra.mxu0 %v1694
    %1764 = vmatpush.bf16.msra.mxu0 %v1693
    %1765 = vmatmul.bf16.gmra.mxu0 %v1557
    %v1766 = vpop.f32.mrf.mxu0
    %v1767 = vadd.f32 %v1549, %v1766
    %v1768 = vpop.f32.mrf.mxu0
    %1769 = vdwg.mxu0
    %1770 = vmatpush.bf16.msra.mxu0 %v1708
    %1771 = vmatpush.bf16.msra.mxu0 %v1707
    %1772 = vmatpush.bf16.msra.mxu0 %v1706
    %1773 = vmatpush.bf16.msra.mxu0 %v1705
    %1774 = vmatpush.bf16.msra.mxu0 %v1704
    %1775 = vmatpush.bf16.msra.mxu0 %v1703
    %1776 = vmatpush.bf16.msra.mxu0 %v1702
    %1777 = vmatpush.bf16.msra.mxu0 %v1701
    %1778 = vmatmul.bf16.gmra.mxu0 %v1558
    %v1779 = vpop.f32.mrf.mxu0
    %v1780 = vadd.f32 %v1767, %v1779
    %v1781 = vpop.f32.mrf.mxu0
    %1782 = vdwg.mxu0
    %1783 = vmatpush.bf16.msra.mxu0 %v1716
    %1784 = vmatpush.bf16.msra.mxu0 %v1715
    %1785 = vmatpush.bf16.msra.mxu0 %v1714
    %1786 = vmatpush.bf16.msra.mxu0 %v1713
    %1787 = vmatpush.bf16.msra.mxu0 %v1712
    %1788 = vmatpush.bf16.msra.mxu0 %v1711
    %1789 = vmatpush.bf16.msra.mxu0 %v1710
    %1790 = vmatpush.bf16.msra.mxu0 %v1709
    %1791 = vmatmul.bf16.gmra.mxu0 %v1559
    %v1792 = vpop.f32.mrf.mxu0
    %v1793 = vadd.f32 %v1780, %v1792
    %v1794 = vpop.f32.mrf.mxu0
    %1795 = vdwg.mxu0
    %1796 = vmatpush.bf16.msra.mxu0 %v1724
    %1797 = vmatpush.bf16.msra.mxu0 %v1723
    %1798 = vmatpush.bf16.msra.mxu0 %v1722
    %1799 = vmatpush.bf16.msra.mxu0 %v1721
    %1800 = vmatpush.bf16.msra.mxu0 %v1720
    %1801 = vmatpush.bf16.msra.mxu0 %v1719
    %1802 = vmatpush.bf16.msra.mxu0 %v1718
    %1803 = vmatpush.bf16.msra.mxu0 %v1717
    %1804 = vmatmul.bf16.gmra.mxu0 %v1560
    %v1805 = vpop.f32.mrf.mxu0
    %v1806 = vadd.f32 %v1793, %v1805
    %v1807 = vpop.f32.mrf.mxu0
    %1808 = vdwg.mxu0
    %v1809 = vmax.f32 %v1806, 0.0
    %v1810 = vpack.c.bf16 %v1809, %v1809
    %v1811 = vld [vmem:[#allocation16] sm:$0x3]
    %vm1812 = vcmask 64512
    %v1814 = vsel %vm1812, %v1811, 0
    %vm1816 = vcmask 1043456
    %v1818 = vsel %vm1816, %v1810, 0
    %1820 = vmatpush.bf16.msra.mxu0 0
    %1821 = vmatpush.bf16.msra.mxu0 0
    %1822 = vmatpush.bf16.msra.mxu0 0
    %1823 = vmatpush.bf16.msra.mxu0 0
    %1824 = vmatpush.bf16.msra.mxu0 0
    %1825 = vmatpush.bf16.msra.mxu0 0
    %1826 = vmatpush.bf16.msra.mxu0 0
    %1827 = vmatpush.bf16.msra.mxu0 %v1818
    %1828 = vmatmul.bf16.gmra.mxu0 %v1814
    %v1829 = vpop.f32.mrf.mxu0
    %v1830 = vadd.f32 0.0, %v1829
    %v1831 = vpop.f32.mrf.mxu0
    %1832 = vdwg.mxu0
    %v1833 = vpack.c.bf16 %v1830, %v1830
    %1834 = vst [vmem:[#allocation2] sm:$0x3] %v1833
    %s1835 = scalar_lea.vmem [#allocation16], 2
    %v1836 = vld [vmem:[%s1835] sm:$0x3]
    %v1838 = vsel %vm1812, %v1836, 0
    %1840 = vmatpush.bf16.msra.mxu0 0
    %1841 = vmatpush.bf16.msra.mxu0 0
    %1842 = vmatpush.bf16.msra.mxu0 0
    %1843 = vmatpush.bf16.msra.mxu0 0
    %1844 = vmatpush.bf16.msra.mxu0 0
    %1845 = vmatpush.bf16.msra.mxu0 0
    %1846 = vmatpush.bf16.msra.mxu0 0
    %1847 = vmatpush.bf16.msra.mxu0 %v1818
    %1848 = vmatmul.bf16.gmra.mxu0 %v1838
    %v1849 = vpop.f32.mrf.mxu0
    %v1850 = vadd.f32 0.0, %v1849
    %v1851 = vpop.f32.mrf.mxu0
    %1852 = vdwg.mxu0
    %v1853 = vpack.c.bf16 %v1850, %v1850
    %1854 = vst [vmem:[#allocation2 + $0x4] sm:$0x3] %v1853
    %s1855 = scalar_lea.vmem [#allocation16], 4
    %v1856 = vld [vmem:[%s1855] sm:$0x3]
    %v1858 = vsel %vm1812, %v1856, 0
    %1860 = vmatpush.bf16.msra.mxu0 0
    %1861 = vmatpush.bf16.msra.mxu0 0
    %1862 = vmatpush.bf16.msra.mxu0 0
    %1863 = vmatpush.bf16.msra.mxu0 0
    %1864 = vmatpush.bf16.msra.mxu0 0
    %1865 = vmatpush.bf16.msra.mxu0 0
    %1866 = vmatpush.bf16.msra.mxu0 0
    %1867 = vmatpush.bf16.msra.mxu0 %v1818
    %1868 = vmatmul.bf16.gmra.mxu0 %v1858
    %v1869 = vpop.f32.mrf.mxu0
    %v1870 = vadd.f32 0.0, %v1869
    %v1871 = vpop.f32.mrf.mxu0
    %1872 = vdwg.mxu0
    %v1873 = vpack.c.bf16 %v1870, %v1870
    %1874 = vst [vmem:[#allocation2 + $0x8] sm:$0x3] %v1873
    %s1875 = scalar_lea.vmem [#allocation16], 6
    %v1876 = vld [vmem:[%s1875] sm:$0x3]
    %v1878 = vsel %vm1812, %v1876, 0
    %1880 = vmatpush.bf16.msra.mxu0 0
    %1881 = vmatpush.bf16.msra.mxu0 0
    %1882 = vmatpush.bf16.msra.mxu0 0
    %1883 = vmatpush.bf16.msra.mxu0 0
    %1884 = vmatpush.bf16.msra.mxu0 0
    %1885 = vmatpush.bf16.msra.mxu0 0
    %1886 = vmatpush.bf16.msra.mxu0 0
    %1887 = vmatpush.bf16.msra.mxu0 %v1818
    %1888 = vmatmul.bf16.gmra.mxu0 %v1878
    %v1889 = vpop.f32.mrf.mxu0
    %v1890 = vadd.f32 0.0, %v1889
    %v1891 = vpop.f32.mrf.mxu0
    %1892 = vdwg.mxu0
    %v1893 = vpack.c.bf16 %v1890, %v1890
    %1894 = vst [vmem:[#allocation2 + $0xc] sm:$0x3] %v1893
    %v1895 = vld [vmem:[#allocation2] sm:$0x33]
    %v1896 = vld [vmem:[#allocation2 + $0x8] sm:$0x33]
    %v1897 = vld [vmem:[%s11] sm:$0xf]
    %v1898 = vld [vmem:[%s11 + $0x4] sm:$0xf]
    %v1899 = vld [vmem:[%s11 + $0x8] sm:$0xf]
    %v1900 = vld [vmem:[%s11 + $0xc] sm:$0xf]
    %v1901 = vld [vmem:[%s11 + $0x10] sm:$0xf]
    %v1902 = vld [vmem:[%s11 + $0x14] sm:$0xf]
    %v1903 = vld [vmem:[%s11 + $0x18] sm:$0xf]
    %v1904 = vld [vmem:[%s11 + $0x1c] sm:$0xf]
    %v1905 = vld [vmem:[%s11 + $0x20] sm:$0xf]
    %v1906 = vld [vmem:[%s11 + $0x24] sm:$0xf]
    %v1907 = vld [vmem:[%s11 + $0x28] sm:$0xf]
    %v1908 = vld [vmem:[%s11 + $0x2c] sm:$0xf]
    %v1909 = vld [vmem:[%s11 + $0x30] sm:$0xf]
    %v1910 = vld [vmem:[%s11 + $0x34] sm:$0xf]
    %v1911 = vld [vmem:[%s11 + $0x38] sm:$0xf]
    %v1912 = vld [vmem:[%s11 + $0x3c] sm:$0xf]
    %v1913 = vld [vmem:[%s11 + $0x40] sm:$0xf]
    %v1914 = vld [vmem:[%s11 + $0x44] sm:$0xf]
    %v1915 = vld [vmem:[%s11 + $0x48] sm:$0xf]
    %v1916 = vld [vmem:[%s11 + $0x4c] sm:$0xf]
    %v1917 = vld [vmem:[%s11 + $0x50] sm:$0xf]
    %v1918 = vld [vmem:[%s11 + $0x54] sm:$0xf]
    %v1919 = vld [vmem:[%s11 + $0x58] sm:$0xf]
    %v1920 = vld [vmem:[%s11 + $0x5c] sm:$0xf]
    %v1921 = vld [vmem:[%s11 + $0x60] sm:$0xf]
    %v1922 = vld [vmem:[%s11 + $0x64] sm:$0xf]
    %v1923 = vld [vmem:[%s11 + $0x68] sm:$0xf]
    %v1924 = vld [vmem:[%s11 + $0x6c] sm:$0xf]
    %v1925 = vld [vmem:[%s11 + $0x70] sm:$0xf]
    %v1926 = vld [vmem:[%s11 + $0x74] sm:$0xf]
    %v1927 = vld [vmem:[%s11 + $0x78] sm:$0xf]
    %v1928 = vld [vmem:[%s11 + $0x7c] sm:$0xf]
    %v1929 = vld [vmem:[%s11 + $0x80] sm:$0xf]
    %v1930 = vld [vmem:[%s11 + $0x84] sm:$0xf]
    %v1931 = vld [vmem:[%s11 + $0x88] sm:$0xf]
    %v1932 = vld [vmem:[%s11 + $0x8c] sm:$0xf]
    %v1933 = vld [vmem:[%s11 + $0x90] sm:$0xf]
    %v1934 = vld [vmem:[%s11 + $0x94] sm:$0xf]
    %v1935 = vld [vmem:[%s11 + $0x98] sm:$0xf]
    %v1936 = vld [vmem:[%s11 + $0x9c] sm:$0xf]
    %v1937 = vld [vmem:[%s11 + $0xa0] sm:$0xf]
    %v1938 = vld [vmem:[%s11 + $0xa4] sm:$0xf]
    %v1939 = vld [vmem:[%s11 + $0xa8] sm:$0xf]
    %v1940 = vld [vmem:[%s11 + $0xac] sm:$0xf]
    %v1941 = vld [vmem:[%s11 + $0xb0] sm:$0xf]
    %v1942 = vld [vmem:[%s11 + $0xb4] sm:$0xf]
    %v1943 = vld [vmem:[%s11 + $0xb8] sm:$0xf]
    %v1944 = vld [vmem:[%s11 + $0xbc] sm:$0xf]
    %v1945 = vld [vmem:[%s11 + $0xc0] sm:$0xf]
    %v1946 = vld [vmem:[%s11 + $0xc4] sm:$0xf]
    %v1947 = vld [vmem:[%s11 + $0xc8] sm:$0xf]
    %v1948 = vld [vmem:[%s11 + $0xcc] sm:$0xf]
    %v1949 = vld [vmem:[%s11 + $0xd0] sm:$0xf]
    %v1950 = vld [vmem:[%s11 + $0xd4] sm:$0xf]
    %v1951 = vld [vmem:[%s11 + $0xd8] sm:$0xf]
    %v1952 = vld [vmem:[%s11 + $0xdc] sm:$0xf]
    %v1953 = vld [vmem:[%s11 + $0xe0] sm:$0xf]
    %v1954 = vld [vmem:[%s11 + $0xe4] sm:$0xf]
    %v1955 = vld [vmem:[%s11 + $0xe8] sm:$0xf]
    %v1956 = vld [vmem:[%s11 + $0xec] sm:$0xf]
    %v1957 = vld [vmem:[%s11 + $0xf0] sm:$0xf]
    %v1958 = vld [vmem:[%s11 + $0xf4] sm:$0xf]
    %v1959 = vld [vmem:[%s11 + $0xf8] sm:$0xf]
    %v1960 = vld [vmem:[%s11 + $0xfc] sm:$0xf]
    %v1961 = vld [vmem:[%s12] sm:$0x1]
    %v1963 = vperm.slane %v1961, 0
    %v1967 = vunpack.c.l.b16 %v1895
    %v1968 = vunpack.c.h.b16 %v1895
    %v1969 = vunpack.c.l.b16 %v1896
    %v1970 = vunpack.c.h.b16 %v1896
    %v1971 = vpack.c.b16 %v1967, %v1967
    %v1972 = vpack.c.b16 %v1968, %v1968
    %v1973 = vpack.c.b16 %v1969, %v1969
    %v1974 = vpack.c.b16 %v1970, %v1970
    %v2043 = vunpack.c.l.b16 %v1897
    %v2044 = vunpack.c.l.b16 %v1898
    %v2045 = vunpack.c.l.b16 %v1899
    %v2046 = vunpack.c.l.b16 %v1900
    %v2047 = vunpack.c.l.b16 %v1901
    %v2048 = vunpack.c.l.b16 %v1902
    %v2049 = vunpack.c.l.b16 %v1903
    %v2050 = vunpack.c.l.b16 %v1904
    %v2051 = vunpack.c.l.b16 %v1905
    %v2052 = vunpack.c.l.b16 %v1906
    %v2053 = vunpack.c.l.b16 %v1907
    %v2054 = vunpack.c.l.b16 %v1908
    %v2055 = vunpack.c.l.b16 %v1909
    %v2056 = vunpack.c.l.b16 %v1910
    %v2057 = vunpack.c.l.b16 %v1911
    %v2058 = vunpack.c.l.b16 %v1912
    %v2059 = vunpack.c.l.b16 %v1913
    %v2060 = vunpack.c.l.b16 %v1914
    %v2061 = vunpack.c.l.b16 %v1915
    %v2062 = vunpack.c.l.b16 %v1916
    %v2063 = vunpack.c.l.b16 %v1917
    %v2064 = vunpack.c.l.b16 %v1918
    %v2065 = vunpack.c.l.b16 %v1919
    %v2066 = vunpack.c.l.b16 %v1920
    %v2067 = vunpack.c.l.b16 %v1921
    %v2068 = vunpack.c.l.b16 %v1922
    %v2069 = vunpack.c.l.b16 %v1923
    %v2070 = vunpack.c.l.b16 %v1924
    %v2071 = vunpack.c.l.b16 %v1925
    %v2072 = vunpack.c.l.b16 %v1926
    %v2073 = vunpack.c.l.b16 %v1927
    %v2074 = vunpack.c.l.b16 %v1928
    %v2075 = vunpack.c.l.b16 %v1929
    %v2076 = vunpack.c.l.b16 %v1930
    %v2077 = vunpack.c.l.b16 %v1931
    %v2078 = vunpack.c.l.b16 %v1932
    %v2079 = vunpack.c.l.b16 %v1933
    %v2080 = vunpack.c.l.b16 %v1934
    %v2081 = vunpack.c.l.b16 %v1935
    %v2082 = vunpack.c.l.b16 %v1936
    %v2083 = vunpack.c.l.b16 %v1937
    %v2084 = vunpack.c.l.b16 %v1938
    %v2085 = vunpack.c.l.b16 %v1939
    %v2086 = vunpack.c.l.b16 %v1940
    %v2087 = vunpack.c.l.b16 %v1941
    %v2088 = vunpack.c.l.b16 %v1942
    %v2089 = vunpack.c.l.b16 %v1943
    %v2090 = vunpack.c.l.b16 %v1944
    %v2091 = vunpack.c.l.b16 %v1945
    %v2092 = vunpack.c.l.b16 %v1946
    %v2093 = vunpack.c.l.b16 %v1947
    %v2094 = vunpack.c.l.b16 %v1948
    %v2095 = vunpack.c.l.b16 %v1949
    %v2096 = vunpack.c.l.b16 %v1950
    %v2097 = vunpack.c.l.b16 %v1951
    %v2098 = vunpack.c.l.b16 %v1952
    %v2099 = vunpack.c.l.b16 %v1953
    %v2100 = vunpack.c.l.b16 %v1954
    %v2101 = vunpack.c.l.b16 %v1955
    %v2102 = vunpack.c.l.b16 %v1956
    %v2103 = vunpack.c.l.b16 %v1957
    %v2104 = vunpack.c.l.b16 %v1958
    %v2105 = vunpack.c.l.b16 %v1959
    %v2106 = vunpack.c.l.b16 %v1960
    %v2107 = vpack.c.b16 %v2044, %v2043
    %v2108 = vpack.c.b16 %v2046, %v2045
    %v2109 = vpack.c.b16 %v2048, %v2047
    %v2110 = vpack.c.b16 %v2050, %v2049
    %v2111 = vpack.c.b16 %v2052, %v2051
    %v2112 = vpack.c.b16 %v2054, %v2053
    %v2113 = vpack.c.b16 %v2056, %v2055
    %v2114 = vpack.c.b16 %v2058, %v2057
    %v2115 = vpack.c.b16 %v2060, %v2059
    %v2116 = vpack.c.b16 %v2062, %v2061
    %v2117 = vpack.c.b16 %v2064, %v2063
    %v2118 = vpack.c.b16 %v2066, %v2065
    %v2119 = vpack.c.b16 %v2068, %v2067
    %v2120 = vpack.c.b16 %v2070, %v2069
    %v2121 = vpack.c.b16 %v2072, %v2071
    %v2122 = vpack.c.b16 %v2074, %v2073
    %v2123 = vpack.c.b16 %v2076, %v2075
    %v2124 = vpack.c.b16 %v2078, %v2077
    %v2125 = vpack.c.b16 %v2080, %v2079
    %v2126 = vpack.c.b16 %v2082, %v2081
    %v2127 = vpack.c.b16 %v2084, %v2083
    %v2128 = vpack.c.b16 %v2086, %v2085
    %v2129 = vpack.c.b16 %v2088, %v2087
    %v2130 = vpack.c.b16 %v2090, %v2089
    %v2131 = vpack.c.b16 %v2092, %v2091
    %v2132 = vpack.c.b16 %v2094, %v2093
    %v2133 = vpack.c.b16 %v2096, %v2095
    %v2134 = vpack.c.b16 %v2098, %v2097
    %v2135 = vpack.c.b16 %v2100, %v2099
    %v2136 = vpack.c.b16 %v2102, %v2101
    %v2137 = vpack.c.b16 %v2104, %v2103
    %v2138 = vpack.c.b16 %v2106, %v2105
    %2171 = vmatpush.bf16.msra.mxu0 %v2114
    %2172 = vmatpush.bf16.msra.mxu0 %v2113
    %2173 = vmatpush.bf16.msra.mxu0 %v2112
    %2174 = vmatpush.bf16.msra.mxu0 %v2111
    %2175 = vmatpush.bf16.msra.mxu0 %v2110
    %2176 = vmatpush.bf16.msra.mxu0 %v2109
    %2177 = vmatpush.bf16.msra.mxu0 %v2108
    %2178 = vmatpush.bf16.msra.mxu0 %v2107
    %2179 = vmatmul.bf16.gmra.mxu0 %v1971
    %v2180 = vpop.f32.mrf.mxu0
    %v2181 = vadd.f32 %v1963, %v2180
    %v2182 = vpop.f32.mrf.mxu0
    %2183 = vdwg.mxu0
    %2184 = vmatpush.bf16.msra.mxu0 %v2122
    %2185 = vmatpush.bf16.msra.mxu0 %v2121
    %2186 = vmatpush.bf16.msra.mxu0 %v2120
    %2187 = vmatpush.bf16.msra.mxu0 %v2119
    %2188 = vmatpush.bf16.msra.mxu0 %v2118
    %2189 = vmatpush.bf16.msra.mxu0 %v2117
    %2190 = vmatpush.bf16.msra.mxu0 %v2116
    %2191 = vmatpush.bf16.msra.mxu0 %v2115
    %2192 = vmatmul.bf16.gmra.mxu0 %v1972
    %v2193 = vpop.f32.mrf.mxu0
    %v2194 = vadd.f32 %v2181, %v2193
    %v2195 = vpop.f32.mrf.mxu0
    %2196 = vdwg.mxu0
    %2197 = vmatpush.bf16.msra.mxu0 %v2130
    %2198 = vmatpush.bf16.msra.mxu0 %v2129
    %2199 = vmatpush.bf16.msra.mxu0 %v2128
    %2200 = vmatpush.bf16.msra.mxu0 %v2127
    %2201 = vmatpush.bf16.msra.mxu0 %v2126
    %2202 = vmatpush.bf16.msra.mxu0 %v2125
    %2203 = vmatpush.bf16.msra.mxu0 %v2124
    %2204 = vmatpush.bf16.msra.mxu0 %v2123
    %2205 = vmatmul.bf16.gmra.mxu0 %v1973
    %v2206 = vpop.f32.mrf.mxu0
    %v2207 = vadd.f32 %v2194, %v2206
    %v2208 = vpop.f32.mrf.mxu0
    %2209 = vdwg.mxu0
    %2210 = vmatpush.bf16.msra.mxu0 %v2138
    %2211 = vmatpush.bf16.msra.mxu0 %v2137
    %2212 = vmatpush.bf16.msra.mxu0 %v2136
    %2213 = vmatpush.bf16.msra.mxu0 %v2135
    %2214 = vmatpush.bf16.msra.mxu0 %v2134
    %2215 = vmatpush.bf16.msra.mxu0 %v2133
    %2216 = vmatpush.bf16.msra.mxu0 %v2132
    %2217 = vmatpush.bf16.msra.mxu0 %v2131
    %2218 = vmatmul.bf16.gmra.mxu0 %v1974
    %v2219 = vpop.f32.mrf.mxu0
    %v2220 = vadd.f32 %v2207, %v2219
    %v2221 = vpop.f32.mrf.mxu0
    %2222 = vdwg.mxu0
    %v2223 = vmax.f32 %v2220, 0.0
    %v2224 = vpack.c.bf16 %v2223, %v2223
    %v2225 = vld [vmem:[%s13] sm:$0xf]
    %vm2226 = vcmask 31744
    %v2228 = vsel %vm2226, %v2225, 0
    %vm2230 = vcmask 1041408
    %v2232 = vsel %vm2230, %v2224, 0
    %2234 = vmatpush.bf16.msra.mxu0 0
    %2235 = vmatpush.bf16.msra.mxu0 0
    %2236 = vmatpush.bf16.msra.mxu0 0
    %2237 = vmatpush.bf16.msra.mxu0 0
    %2238 = vmatpush.bf16.msra.mxu0 0
    %2239 = vmatpush.bf16.msra.mxu0 0
    %2240 = vmatpush.bf16.msra.mxu0 0
    %2241 = vmatpush.bf16.msra.mxu0 %v2232
    %2242 = vmatmul.bf16.gmra.mxu0 %v2228
    %v2243 = vpop.f32.mrf.mxu0
    %v2244 = vadd.f32 0.0, %v2243
    %v2245 = vpop.f32.mrf.mxu0
    %2246 = vdwg.mxu0
    %v2247 = vpack.c.bf16 %v2244, %v2244
    %v2248 = vld [vmem:[%s14] sm:$0xf]
    %v2249 = vld [vmem:[%s14 + $0x4] sm:$0xf]
    %v2250 = vld [vmem:[%s14 + $0x8] sm:$0xf]
    %v2251 = vld [vmem:[%s14 + $0xc] sm:$0xf]
    %v2252 = vld [vmem:[%s14 + $0x10] sm:$0xf]
    %v2253 = vld [vmem:[%s14 + $0x14] sm:$0xf]
    %v2254 = vld [vmem:[%s14 + $0x18] sm:$0xf]
    %v2255 = vld [vmem:[%s14 + $0x1c] sm:$0xf]
    %v2256 = vld [vmem:[%s15] sm:$0x1]
    %v2258 = vperm.slane %v2256, 0
    %v2268 = vunpack.c.l.b16 %v2248
    %v2269 = vunpack.c.l.b16 %v2249
    %v2270 = vunpack.c.l.b16 %v2250
    %v2271 = vunpack.c.l.b16 %v2251
    %v2272 = vunpack.c.l.b16 %v2252
    %v2273 = vunpack.c.l.b16 %v2253
    %v2274 = vunpack.c.l.b16 %v2254
    %v2275 = vunpack.c.l.b16 %v2255
    %v2276 = vpack.c.b16 %v2269, %v2268
    %v2277 = vpack.c.b16 %v2271, %v2270
    %v2278 = vpack.c.b16 %v2273, %v2272
    %v2279 = vpack.c.b16 %v2275, %v2274
    %v2285 = vsel %vm854, %v2247, 0
    %2287 = vmatpush.bf16.msra.mxu0 0
    %2288 = vmatpush.bf16.msra.mxu0 0
    %2289 = vmatpush.bf16.msra.mxu0 0
    %2290 = vmatpush.bf16.msra.mxu0 0
    %2291 = vmatpush.bf16.msra.mxu0 %v2279
    %2292 = vmatpush.bf16.msra.mxu0 %v2278
    %2293 = vmatpush.bf16.msra.mxu0 %v2277
    %2294 = vmatpush.bf16.msra.mxu0 %v2276
    %2295 = vmatmul.bf16.gmra.mxu0 %v2285
    %v2296 = vpop.f32.mrf.mxu0
    %v2297 = vadd.f32 %v2258, %v2296
    %v2298 = vpop.f32.mrf.mxu0
    %2299 = vdwg.mxu0
    %2300 = vst [vmem:[%s16] sm:$0xff] %v2297
    // Predicated region
    $region102: #{encode.1} parent=1 // pred_check
      _
    $region103: #{encode.1} parent=1 // pred_check_branch
      %2302 = sbr.rel (0) target = $region105
    $region104: #{encode.1} parent=1 // pred_region
      _
    $region105: #{encode.1} parent=1 // pred_fallthru
      _
    // Predicated region
    $region106: #{encode.1} parent=1 // pred_check
      _
    $region107: #{encode.1} parent=1 // pred_check_branch
      %2304 = sbr.rel (0) target = $region109
    $region108: #{encode.1} parent=1 // pred_region
      _
    $region109: #{encode.1} parent=1 // pred_fallthru
      _
    %2305 = vsyncpa [#allocation4], 1
    %2306 = vsyncpa [#allocation6], 1
    %2307 = vsyncpa [#allocation9], 1
    %2308 = vsyncpa [#allocation12], 1
    %2309 = vsyncpa [#allocation15], 1

</llo_original>
